<compile_context>
chip_gen: v5e
topology: v5e:2x2
jax: 0.10.0
libtpu: 0.0.40
codegen_flags: <defaults>
</compile_context>

<pallas_src>
import jax
import jax.numpy as jnp
import numpy as np
from jax.experimental import pallas as pl
from jax.experimental.pallas import tpu as pltpu

EPS = 1e-5


def _dac_kernel(obs_ref, ref_ref, wm1_ref, wm2_ref, ws1_ref, ws2_ref, out_ref):
    # obs_ref / ref_ref / out_ref : (1, C, HW) block for this batch element
    # wm1_ref / ws1_ref : (Ch, C)   (PyTorch conv1 weight, 1x1 squeezed)
    # wm2_ref / ws2_ref : (C, Ch)   (PyTorch conv2 weight, 1x1 squeezed)
    hw = obs_ref.shape[2]
    inv_hw = 1.0 / hw
    inv_hwm1 = 1.0 / (hw - 1)   # unbiased variance (torch default); hw==1 -> NaN in torch too

    obs = obs_ref[0].astype(jnp.float32)   # (C, HW)
    ref = ref_ref[0].astype(jnp.float32)   # (C, HW)

    def stats(x):
        # single-pass mean / std over the spatial (lane) axis
        s = jnp.sum(x, axis=1, keepdims=True)          # (C, 1)
        ss = jnp.sum(x * x, axis=1, keepdims=True)     # (C, 1)
        mean = s * inv_hw
        var = (ss - s * mean) * inv_hwm1               # = (sum x^2 - hw*mean^2)/(hw-1)
        return mean, jnp.sqrt(var + EPS)

    o_mean, o_std = stats(obs)
    r_mean, r_std = stats(ref)

    def mlp(v, w1, w2):
        # 1x1 convs on a (N,C,1,1) tensor == dense layers on a (C,1) column
        h = jnp.maximum(jnp.dot(w1, v, preferred_element_type=jnp.float32), 0.0)  # (Ch,1)
        return jnp.dot(w2, h, preferred_element_type=jnp.float32)                 # (C, 1)

    rm = mlp(r_mean, wm1_ref[...].astype(jnp.float32), wm2_ref[...].astype(jnp.float32))
    rs = mlp(r_std, ws1_ref[...].astype(jnp.float32), ws2_ref[...].astype(jnp.float32))

    # fold normalize + affine into one per-channel scale/shift (divide only on (C,1))
    inv_o_std = 1.0 / o_std                    # (C, 1)
    scale = rs * inv_o_std                     # (C, 1)
    shift = rm - o_mean * scale                # (C, 1)
    out_ref[0] = (obs * scale + shift).astype(out_ref.dtype)


def dac_pallas(observed_feat, referred_feat, wm1, wm2, ws1, ws2):
    """observed_feat / referred_feat: NCHW. Weights in PyTorch Conv2d layout
    (1x1 kernels squeezed): wm1, ws1: (Ch, C);  wm2, ws2: (C, Ch)."""
    N, C, H, W = observed_feat.shape
    HW = H * W
    Ch = wm1.shape[0]

    # NCHW -> (N, C, HW): pure reshape (contiguous), no transpose / HBM pass.
    obs = observed_feat.reshape(N, C, HW)
    ref = referred_feat.reshape(N, C, HW)

    # VMEM budget: obs + ref + out slabs, double-buffered, plus weights & headroom.
    itemsize = jnp.dtype(observed_feat.dtype).itemsize
    slab = C * HW * itemsize
    need = 3 * 2 * slab + 4 * C * Ch * 4 + (1 << 20)
    vmem_limit = int(min(max(need, 32 * 1024 * 1024), 100 * 1024 * 1024))

    out = pl.pallas_call(
        _dac_kernel,
        out_shape=jax.ShapeDtypeStruct((N, C, HW), observed_feat.dtype),
        grid_spec=pltpu.PrefetchScalarGridSpec(
            num_scalar_prefetch=0,
            grid=(N,),
            in_specs=[
                pl.BlockSpec((1, C, HW), lambda n: (n, 0, 0)),   # observed
                pl.BlockSpec((1, C, HW), lambda n: (n, 0, 0)),   # referred
                pl.BlockSpec((Ch, C), lambda n: (0, 0)),         # mean-branch conv1
                pl.BlockSpec((C, Ch), lambda n: (0, 0)),         # mean-branch conv2
                pl.BlockSpec((Ch, C), lambda n: (0, 0)),         # std-branch conv1
                pl.BlockSpec((C, Ch), lambda n: (0, 0)),         # std-branch conv2
            ],
            out_specs=pl.BlockSpec((1, C, HW), lambda n: (n, 0, 0)),
        ),
        compiler_params=pltpu.CompilerParams(
            dimension_semantics=("parallel",),
            vmem_limit_bytes=vmem_limit),
    )(obs, ref, wm1, wm2, ws1, ws2)

    # (N, C, HW) -> NCHW: free reshape.
    return out.reshape(N, C, H, W)


def dac_reference(observed_feat, referred_feat, wm1, wm2, ws1, ws2):
    """Pure-JAX mirror of the PyTorch DAC.forward (NCHW)."""
    N, C, H, W = observed_feat.shape

    def calc_mean_std(x):
        xf = x.reshape(N, C, -1)
        mean = xf.mean(axis=2)
        var = xf.var(axis=2, ddof=1) + EPS
        return mean, jnp.sqrt(var)                                    # (N, C)

    r_mean, r_std = calc_mean_std(referred_feat)
    o_mean, o_std = calc_mean_std(observed_feat)

    def mlp(v, w1, w2):   # v: (N, C); w1: (Ch, C); w2: (C, Ch)
        h = jnp.maximum(v @ w1.T, 0.0)
        return h @ w2.T

    rm = mlp(r_mean, wm1, wm2)
    rs = mlp(r_std, ws1, ws2)

    normalized = (observed_feat - o_mean[:, :, None, None]) / o_std[:, :, None, None]
    return normalized * rs[:, :, None, None] + rm[:, :, None, None]


if __name__ == "__main__":
    # n_channels must be >= 16 so that n_channels // 16 >= 1.
    N, C, H, W = 2, 128, 16, 16
    Ch = C // 16

    key = jax.random.PRNGKey(0)
    k_obs, k_ref, k1, k2, k3, k4 = jax.random.split(key, 6)

    observed = jax.random.normal(k_obs, (N, C, H, W), dtype=jnp.float32)
    referred = 0.5 * jax.random.normal(k_ref, (N, C, H, W), dtype=jnp.float32) + 0.3

    # PyTorch Conv2d 1x1 weights (squeezed of the 1x1 spatial dims).
    wm1 = 0.1 * jax.random.normal(k1, (Ch, C), dtype=jnp.float32)   # mean branch conv1
    wm2 = 0.1 * jax.random.normal(k2, (C, Ch), dtype=jnp.float32)   # mean branch conv2
    ws1 = 0.1 * jax.random.normal(k3, (Ch, C), dtype=jnp.float32)   # std branch conv1
    ws2 = 0.1 * jax.random.normal(k4, (C, Ch), dtype=jnp.float32)   # std branch conv2

    out = dac_pallas(observed, referred, wm1, wm2, ws1, ws2)
    out = jax.block_until_ready(out)

    ref_out = jax.block_until_ready(
        dac_reference(observed, referred, wm1, wm2, ws1, ws2))

    np.testing.assert_allclose(np.asarray(out), np.asarray(ref_out),
                               rtol=1e-4, atol=1e-4)
    print("KERNEL_OK")
</pallas_src>

<mosaic_0001>
module attributes {stable_mosaic.version = 11 : i64} {
  func.func @_dac_kernel(%arg0: i32, %arg1: memref<1x128x256xf32, #tpu.memory_space<vmem>>, %arg2: memref<1x128x256xf32, #tpu.memory_space<vmem>>, %arg3: memref<8x128xf32, #tpu.memory_space<vmem>>, %arg4: memref<128x8xf32, #tpu.memory_space<vmem>>, %arg5: memref<8x128xf32, #tpu.memory_space<vmem>>, %arg6: memref<128x8xf32, #tpu.memory_space<vmem>>, %arg7: memref<1x128x256xf32, #tpu.memory_space<vmem>>) attributes {dimension_semantics = [#tpu.dimension_semantics<parallel>], iteration_bounds = array<i64: 2>, scalar_prefetch = 0 : i64, scratch_operands = 0 : i64, tpu.core_type = #tpu.core_type<tc>, window_params = [{transform_indices = @transform_0, window_bounds = array<i64: 1, 128, 256>}, {transform_indices = @transform_1, window_bounds = array<i64: 1, 128, 256>}, {pipeline_mode = #tpu.pipeline_mode<synchronous>, transform_indices = @transform_2, window_bounds = array<i64: 8, 128>}, {pipeline_mode = #tpu.pipeline_mode<synchronous>, transform_indices = @transform_3, window_bounds = array<i64: 128, 8>}, {pipeline_mode = #tpu.pipeline_mode<synchronous>, transform_indices = @transform_4, window_bounds = array<i64: 8, 128>}, {pipeline_mode = #tpu.pipeline_mode<synchronous>, transform_indices = @transform_5, window_bounds = array<i64: 128, 8>}, {transform_indices = @transform_6, window_bounds = array<i64: 1, 128, 256>}]} {
    %c0 = arith.constant 0 : index
    %c0_0 = arith.constant 0 : index
    %c0_1 = arith.constant 0 : index
    %0 = vector.load %arg1[%c0, %c0_0, %c0_1] : memref<1x128x256xf32, #tpu.memory_space<vmem>>, vector<1x128x256xf32>
    %1 = vector.shape_cast %0 : vector<1x128x256xf32> to vector<128x256xf32>
    %c0_2 = arith.constant 0 : index
    %c0_3 = arith.constant 0 : index
    %c0_4 = arith.constant 0 : index
    %2 = vector.load %arg2[%c0_2, %c0_3, %c0_4] : memref<1x128x256xf32, #tpu.memory_space<vmem>>, vector<1x128x256xf32>
    %3 = vector.shape_cast %2 : vector<1x128x256xf32> to vector<128x256xf32>
    %cst = arith.constant dense<0.000000e+00> : vector<128xf32>
    %4 = vector.multi_reduction <add>, %1, %cst [1] : vector<128x256xf32> to vector<128xf32>
    %5 = vector.shape_cast %4 : vector<128xf32> to vector<128x1xf32>
    %6 = arith.mulf %1, %1 : vector<128x256xf32>
    %cst_5 = arith.constant dense<0.000000e+00> : vector<128xf32>
    %7 = vector.multi_reduction <add>, %6, %cst_5 [1] : vector<128x256xf32> to vector<128xf32>
    %8 = vector.shape_cast %7 : vector<128xf32> to vector<128x1xf32>
    %cst_6 = arith.constant 3.906250e-03 : f32
    %9 = vector.broadcast %cst_6 : f32 to vector<128x1xf32>
    %10 = arith.mulf %5, %9 : vector<128x1xf32>
    %11 = arith.mulf %5, %10 : vector<128x1xf32>
    %12 = arith.subf %8, %11 : vector<128x1xf32>
    %cst_7 = arith.constant 0.00392156886 : f32
    %13 = vector.broadcast %cst_7 : f32 to vector<128x1xf32>
    %14 = arith.mulf %12, %13 : vector<128x1xf32>
    %cst_8 = arith.constant 9.99999974E-6 : f32
    %15 = vector.broadcast %cst_8 : f32 to vector<128x1xf32>
    %16 = arith.addf %14, %15 : vector<128x1xf32>
    %17 = math.sqrt %16 : vector<128x1xf32>
    %cst_9 = arith.constant dense<0.000000e+00> : vector<128xf32>
    %18 = vector.multi_reduction <add>, %3, %cst_9 [1] : vector<128x256xf32> to vector<128xf32>
    %19 = vector.shape_cast %18 : vector<128xf32> to vector<128x1xf32>
    %20 = arith.mulf %3, %3 : vector<128x256xf32>
    %cst_10 = arith.constant dense<0.000000e+00> : vector<128xf32>
    %21 = vector.multi_reduction <add>, %20, %cst_10 [1] : vector<128x256xf32> to vector<128xf32>
    %22 = vector.shape_cast %21 : vector<128xf32> to vector<128x1xf32>
    %cst_11 = arith.constant 3.906250e-03 : f32
    %23 = vector.broadcast %cst_11 : f32 to vector<128x1xf32>
    %24 = arith.mulf %19, %23 : vector<128x1xf32>
    %25 = arith.mulf %19, %24 : vector<128x1xf32>
    %26 = arith.subf %22, %25 : vector<128x1xf32>
    %cst_12 = arith.constant 0.00392156886 : f32
    %27 = vector.broadcast %cst_12 : f32 to vector<128x1xf32>
    %28 = arith.mulf %26, %27 : vector<128x1xf32>
    %cst_13 = arith.constant 9.99999974E-6 : f32
    %29 = vector.broadcast %cst_13 : f32 to vector<128x1xf32>
    %30 = arith.addf %28, %29 : vector<128x1xf32>
    %31 = math.sqrt %30 : vector<128x1xf32>
    %c0_14 = arith.constant 0 : index
    %c0_15 = arith.constant 0 : index
    %32 = vector.load %arg3[%c0_14, %c0_15] : memref<8x128xf32, #tpu.memory_space<vmem>>, vector<8x128xf32>
    %c0_16 = arith.constant 0 : index
    %c0_17 = arith.constant 0 : index
    %33 = vector.load %arg4[%c0_16, %c0_17] : memref<128x8xf32, #tpu.memory_space<vmem>>, vector<128x8xf32>
    %cst_18 = arith.constant dense<0.000000e+00> : vector<8x1xf32>
    %34 = tpu.matmul %32, %24, %cst_18 {dimension_numbers = #tpu.dot_dimension_numbers<[1], [0], [0], [1], [0, 0, 1, 1], [], []>} : vector<8x128xf32>, vector<128x1xf32>, vector<8x1xf32> -> vector<8x1xf32>
    %cst_19 = arith.constant 0.000000e+00 : f32
    %35 = vector.broadcast %cst_19 : f32 to vector<8x1xf32>
    %36 = arith.maximumf %34, %35 : vector<8x1xf32>
    %cst_20 = arith.constant dense<0.000000e+00> : vector<128x1xf32>
    %37 = tpu.matmul %33, %36, %cst_20 {dimension_numbers = #tpu.dot_dimension_numbers<[1], [0], [0], [1], [0, 0, 1, 1], [], []>} : vector<128x8xf32>, vector<8x1xf32>, vector<128x1xf32> -> vector<128x1xf32>
    %c0_21 = arith.constant 0 : index
    %c0_22 = arith.constant 0 : index
    %38 = vector.load %arg5[%c0_21, %c0_22] : memref<8x128xf32, #tpu.memory_space<vmem>>, vector<8x128xf32>
    %c0_23 = arith.constant 0 : index
    %c0_24 = arith.constant 0 : index
    %39 = vector.load %arg6[%c0_23, %c0_24] : memref<128x8xf32, #tpu.memory_space<vmem>>, vector<128x8xf32>
    %cst_25 = arith.constant dense<0.000000e+00> : vector<8x1xf32>
    %40 = tpu.matmul %38, %31, %cst_25 {dimension_numbers = #tpu.dot_dimension_numbers<[1], [0], [0], [1], [0, 0, 1, 1], [], []>} : vector<8x128xf32>, vector<128x1xf32>, vector<8x1xf32> -> vector<8x1xf32>
    %cst_26 = arith.constant 0.000000e+00 : f32
    %41 = vector.broadcast %cst_26 : f32 to vector<8x1xf32>
    %42 = arith.maximumf %40, %41 : vector<8x1xf32>
    %cst_27 = arith.constant dense<0.000000e+00> : vector<128x1xf32>
    %43 = tpu.matmul %39, %42, %cst_27 {dimension_numbers = #tpu.dot_dimension_numbers<[1], [0], [0], [1], [0, 0, 1, 1], [], []>} : vector<128x8xf32>, vector<8x1xf32>, vector<128x1xf32> -> vector<128x1xf32>
    %cst_28 = arith.constant 1.000000e+00 : f32
    %44 = vector.broadcast %cst_28 : f32 to vector<128x1xf32>
    %45 = arith.divf %44, %17 : vector<128x1xf32>
    %46 = arith.mulf %43, %45 : vector<128x1xf32>
    %47 = arith.mulf %10, %46 : vector<128x1xf32>
    %48 = arith.subf %37, %47 : vector<128x1xf32>
    %49 = vector.broadcast %46 : vector<128x1xf32> to vector<128x256xf32>
    %50 = arith.mulf %1, %49 : vector<128x256xf32>
    %51 = vector.broadcast %48 : vector<128x1xf32> to vector<128x256xf32>
    %52 = arith.addf %50, %51 : vector<128x256xf32>
    %c0_29 = arith.constant 0 : index
    %c0_30 = arith.constant 0 : index
    %c0_31 = arith.constant 0 : index
    %53 = vector.load %arg7[%c0_29, %c0_30, %c0_31] : memref<1x128x256xf32, #tpu.memory_space<vmem>>, vector<1x128x256xf32>
    %54 = vector.shape_cast %53 : vector<1x128x256xf32> to vector<128x256xf32>
    %55 = vector.shape_cast %52 : vector<128x256xf32> to vector<1x128x256xf32>
    tpu.vector_store %arg7[%c0_29, %c0_30, %c0_31], %55 {strides = array<i32>} : memref<1x128x256xf32, #tpu.memory_space<vmem>>, vector<1x128x256xf32>,
    return
  }
  func.func @transform_0(%arg0: i32) -> (i32, i32, i32) {
    %c0_i32 = arith.constant 0 : i32
    %c0_i32_0 = arith.constant 0 : i32
    %c0_i32_1 = arith.constant 0 : i32
    return %arg0, %c0_i32, %c0_i32_0 : i32, i32, i32
  }
  func.func @transform_1(%arg0: i32) -> (i32, i32, i32) {
    %c0_i32 = arith.constant 0 : i32
    %c0_i32_0 = arith.constant 0 : i32
    %c0_i32_1 = arith.constant 0 : i32
    return %arg0, %c0_i32, %c0_i32_0 : i32, i32, i32
  }
  func.func @transform_2(%arg0: i32) -> (i32, i32) {
    %c0_i32 = arith.constant 0 : i32
    %c0_i32_0 = arith.constant 0 : i32
    %c0_i32_1 = arith.constant 0 : i32
    return %c0_i32, %c0_i32_0 : i32, i32
  }
  func.func @transform_3(%arg0: i32) -> (i32, i32) {
    %c0_i32 = arith.constant 0 : i32
    %c0_i32_0 = arith.constant 0 : i32
    %c0_i32_1 = arith.constant 0 : i32
    return %c0_i32, %c0_i32_0 : i32, i32
  }
  func.func @transform_4(%arg0: i32) -> (i32, i32) {
    %c0_i32 = arith.constant 0 : i32
    %c0_i32_0 = arith.constant 0 : i32
    %c0_i32_1 = arith.constant 0 : i32
    return %c0_i32, %c0_i32_0 : i32, i32
  }
  func.func @transform_5(%arg0: i32) -> (i32, i32) {
    %c0_i32 = arith.constant 0 : i32
    %c0_i32_0 = arith.constant 0 : i32
    %c0_i32_1 = arith.constant 0 : i32
    return %c0_i32, %c0_i32_0 : i32, i32
  }
  func.func @transform_6(%arg0: i32) -> (i32, i32, i32) {
    %c0_i32 = arith.constant 0 : i32
    %c0_i32_0 = arith.constant 0 : i32
    %c0_i32_1 = arith.constant 0 : i32
    return %arg0, %c0_i32, %c0_i32_0 : i32, i32, i32
  }
}

</mosaic_0001>

<llo_original>
// kernel: tpu_custom_call.1
$region0: #{tpu_custom_call.1}
  #allocation0 [shape = 'u32[]', space=smem, size = 0x4, offset = 0x4, fixed_abs, tag = 'smem constant byte address 0x4 - core index']
  #allocation1 [shape = 'u32[72,128]{1,0:T(1,128)}', space=vmem, size = 0x9000, scoped, tag = 'internal scratch']
  %s0 = inlined_call_operand.hbm [shape: f32[2,128,256], index: 0, kind: input, shape index: {}]
  %s1 = inlined_call_operand.hbm [shape: f32[2,128,256], index: 1, kind: input, shape index: {}]
  %s2 = inlined_call_operand.vmem [shape: f32[8,128], index: 2, kind: input, shape index: {}]
  %s3 = inlined_call_operand.vmem [shape: f32[128,8], index: 3, kind: input, shape index: {}]
  %s4 = inlined_call_operand.vmem [shape: f32[8,128], index: 4, kind: input, shape index: {}]
  %s5 = inlined_call_operand.vmem [shape: f32[128,8], index: 5, kind: input, shape index: {}]
  %s6 = inlined_call_operand.hbm [shape: f32[2,128,256], index: 6, kind: output, shape index: {}]
  %s7 = sld [smem:[#allocation0]]
  $region65: #{tpu_custom_call.1} parent=0
    _
  %s9 = ssub.s32 1, %s7
  %s10 = scalar_select 0, %s9, %s7
  $region1: #{tpu_custom_call.1} parent=0
    #allocation2 [shape = 'u8[262144]{0}', space=vmem, size = 0x40000, scoped, tag = 'input window, operand 0']
    #allocation3 [shape = 's32[2]{0}', space=sflag, size = 0x8, scoped, tag = 'scoped memory for tpu_custom_call.1']
    #allocation4 [shape = 's32[2]{0}', space=sflag, size = 0x8, scoped, tag = 'scoped memory for tpu_custom_call.1']
    #allocation5 [shape = 'u8[262144]{0}', space=vmem, size = 0x40000, scoped, tag = 'input window, operand 1']
    #allocation6 [shape = 's32[2]{0}', space=sflag, size = 0x8, scoped, tag = 'scoped memory for tpu_custom_call.1']
    #allocation7 [shape = 'u8[262144]{0}', space=vmem, size = 0x40000, scoped, tag = 'output window, operand 0']
    %11 = vsyncpa [#allocation3], 0
    %s12 = scalar_lea.sflag [#allocation3], 1
    %13 = vsyncpa %s12, 0
    %14 = vsyncpa [#allocation6], 0
    %s15 = scalar_lea.sflag [#allocation6], 1
    %16 = vsyncpa %s15, 0
    %17 = vsyncpa [#allocation4], 0
    %s18 = scalar_lea.sflag [#allocation4], 1
    %19 = vsyncpa %s18, 0
    loop: start=0, step=1, limit=4
    $region2: #{tpu_custom_call.1} parent=1 // loop_pre_header
      _
    $region3: #{tpu_custom_call.1} parent=1 // loop_header
      %s21 = sphi 0, %s25
      %p22 = scmp.ge.s32.totalorder %s21, 4
      %s31 = sphi 0, %s33
      %s34 = sphi 0, %s31
      %s35 = sphi 0, %s34
      %s51 = sphi 0, %s35
      %s57 = sphi 0, %s59
      %s60 = sphi 0, %s57
      %s61 = sphi 0, %s60
      %s77 = sphi 0, %s61
      %s81 = sphi 0, %s81
      %s83 = sphi 0, %s81
      %s84 = sphi 0, %s83
      %s98 = sphi 0, %s84
      %s102 = sphi 0, %s102
      %s104 = sphi 0, %s102
      %s105 = sphi 0, %s104
      %s119 = sphi 0, %s105
      %s123 = sphi 0, %s123
      %s125 = sphi 0, %s123
      %s126 = sphi 0, %s125
      %s140 = sphi 0, %s126
      %s144 = sphi 0, %s144
      %s146 = sphi 0, %s144
      %s147 = sphi 0, %s146
      %s161 = sphi 0, %s147
      %s167 = sphi 0, %s169
      %s170 = sphi 0, %s167
      %s171 = sphi 0, %s170
      %s187 = sphi 0, %s171
    $region4: #{tpu_custom_call.1} parent=1 // loop_header_branch
      %24 = sbr.rel (%p22) target = $region8
    $region5: #{tpu_custom_call.1} parent=1 // loop_body
      %s26 = ssub.s32 %s21, 1
      %s27 = ssub.s32 %s21, 2
      %s28 = sadd.s32 %s21, 1
      %s29 = ssub.s32 %s21, %s28
      %p30 = scmp.eq.s32.totalorder %s29, 0
      %s32 = sadd.s32 %s31, 1
      %s33 = scalar_select %p30, %s31, %s32
      %p36 = pneg %p30
      %p37 = scmp.eq.s32.totalorder %s21, 1
      %p38 = por %p36, %p37
      %p39 = scmp.ne.s32.totalorder %s31, %s34
      %p40 = scmp.eq.s32.totalorder %s21, 0
      %p41 = por %p39, %p40
      %p42 = scmp.ne.s32.totalorder %s31, %s34
      %p43 = scmp.eq.s32.totalorder %s26, 1
      %p44 = por %p42, %p43
      %p45 = scmp.ne.s32.totalorder %s34, %s35
      %p46 = scmp.eq.s32.totalorder %s26, 0
      %p47 = por %p45, %p46
      %p48 = scmp.ne.s32.totalorder %s34, %s35
      %p49 = scmp.eq.s32.totalorder %s27, 1
      %p50 = por %p48, %p49
      %p52 = scmp.ne.s32.totalorder %s35, %s51
      %p53 = scmp.eq.s32.totalorder %s27, 0
      %p54 = por %p52, %p53
      %s55 = ssub.s32 %s21, %s28
      %p56 = scmp.eq.s32.totalorder %s55, 0
      %s58 = sadd.s32 %s57, 1
      %s59 = scalar_select %p56, %s57, %s58
      %p62 = pneg %p56
      %p63 = scmp.eq.s32.totalorder %s21, 1
      %p64 = por %p62, %p63
      %p65 = scmp.ne.s32.totalorder %s57, %s60
      %p66 = scmp.eq.s32.totalorder %s21, 0
      %p67 = por %p65, %p66
      %p68 = scmp.ne.s32.totalorder %s57, %s60
      %p69 = scmp.eq.s32.totalorder %s26, 1
      %p70 = por %p68, %p69
      %p71 = scmp.ne.s32.totalorder %s60, %s61
      %p72 = scmp.eq.s32.totalorder %s26, 0
      %p73 = por %p71, %p72
      %p74 = scmp.ne.s32.totalorder %s60, %s61
      %p75 = scmp.eq.s32.totalorder %s27, 1
      %p76 = por %p74, %p75
      %p78 = scmp.ne.s32.totalorder %s61, %s77
      %p79 = scmp.eq.s32.totalorder %s27, 0
      %p80 = por %p78, %p79
      %s82 = sadd.s32 %s81, 1
      %p85 = scmp.eq.s32.totalorder %s21, 1
      %p86 = scmp.ne.s32.totalorder %s81, %s83
      %p87 = scmp.eq.s32.totalorder %s21, 0
      %p88 = por %p86, %p87
      %p89 = scmp.ne.s32.totalorder %s81, %s83
      %p90 = scmp.eq.s32.totalorder %s26, 1
      %p91 = por %p89, %p90
      %p92 = scmp.ne.s32.totalorder %s83, %s84
      %p93 = scmp.eq.s32.totalorder %s26, 0
      %p94 = por %p92, %p93
      %p95 = scmp.ne.s32.totalorder %s83, %s84
      %p96 = scmp.eq.s32.totalorder %s27, 1
      %p97 = por %p95, %p96
      %p99 = scmp.ne.s32.totalorder %s84, %s98
      %p100 = scmp.eq.s32.totalorder %s27, 0
      %p101 = por %p99, %p100
      %s103 = sadd.s32 %s102, 1
      %p106 = scmp.eq.s32.totalorder %s21, 1
      %p107 = scmp.ne.s32.totalorder %s102, %s104
      %p108 = scmp.eq.s32.totalorder %s21, 0
      %p109 = por %p107, %p108
      %p110 = scmp.ne.s32.totalorder %s102, %s104
      %p111 = scmp.eq.s32.totalorder %s26, 1
      %p112 = por %p110, %p111
      %p113 = scmp.ne.s32.totalorder %s104, %s105
      %p114 = scmp.eq.s32.totalorder %s26, 0
      %p115 = por %p113, %p114
      %p116 = scmp.ne.s32.totalorder %s104, %s105
      %p117 = scmp.eq.s32.totalorder %s27, 1
      %p118 = por %p116, %p117
      %p120 = scmp.ne.s32.totalorder %s105, %s119
      %p121 = scmp.eq.s32.totalorder %s27, 0
      %p122 = por %p120, %p121
      %s124 = sadd.s32 %s123, 1
      %p127 = scmp.eq.s32.totalorder %s21, 1
      %p128 = scmp.ne.s32.totalorder %s123, %s125
      %p129 = scmp.eq.s32.totalorder %s21, 0
      %p130 = por %p128, %p129
      %p131 = scmp.ne.s32.totalorder %s123, %s125
      %p132 = scmp.eq.s32.totalorder %s26, 1
      %p133 = por %p131, %p132
      %p134 = scmp.ne.s32.totalorder %s125, %s126
      %p135 = scmp.eq.s32.totalorder %s26, 0
      %p136 = por %p134, %p135
      %p137 = scmp.ne.s32.totalorder %s125, %s126
      %p138 = scmp.eq.s32.totalorder %s27, 1
      %p139 = por %p137, %p138
      %p141 = scmp.ne.s32.totalorder %s126, %s140
      %p142 = scmp.eq.s32.totalorder %s27, 0
      %p143 = por %p141, %p142
      %s145 = sadd.s32 %s144, 1
      %p148 = scmp.eq.s32.totalorder %s21, 1
      %p149 = scmp.ne.s32.totalorder %s144, %s146
      %p150 = scmp.eq.s32.totalorder %s21, 0
      %p151 = por %p149, %p150
      %p152 = scmp.ne.s32.totalorder %s144, %s146
      %p153 = scmp.eq.s32.totalorder %s26, 1
      %p154 = por %p152, %p153
      %p155 = scmp.ne.s32.totalorder %s146, %s147
      %p156 = scmp.eq.s32.totalorder %s26, 0
      %p157 = por %p155, %p156
      %p158 = scmp.ne.s32.totalorder %s146, %s147
      %p159 = scmp.eq.s32.totalorder %s27, 1
      %p160 = por %p158, %p159
      %p162 = scmp.ne.s32.totalorder %s147, %s161
      %p163 = scmp.eq.s32.totalorder %s27, 0
      %p164 = por %p162, %p163
      %s165 = ssub.s32 %s21, %s28
      %p166 = scmp.eq.s32.totalorder %s165, 0
      %s168 = sadd.s32 %s167, 1
      %s169 = scalar_select %p166, %s167, %s168
      %p172 = pneg %p166
      %p173 = scmp.eq.s32.totalorder %s21, 1
      %p174 = por %p172, %p173
      %p175 = scmp.ne.s32.totalorder %s167, %s170
      %p176 = scmp.eq.s32.totalorder %s21, 0
      %p177 = por %p175, %p176
      %p178 = scmp.ne.s32.totalorder %s167, %s170
      %p179 = scmp.eq.s32.totalorder %s26, 1
      %p180 = por %p178, %p179
      %p181 = scmp.ne.s32.totalorder %s170, %s171
      %p182 = scmp.eq.s32.totalorder %s26, 0
      %p183 = por %p181, %p182
      %p184 = scmp.ne.s32.totalorder %s170, %s171
      %p185 = scmp.eq.s32.totalorder %s27, 1
      %p186 = por %p184, %p185
      %p188 = scmp.ne.s32.totalorder %s171, %s187
      %p189 = scmp.eq.s32.totalorder %s27, 0
      %p190 = por %p188, %p189
      %p191 = scmp.le.s32.totalorder 1, %s21
      %p192 = scmp.lt.s32.totalorder %s21, 3
      %p193 = pnand %p191, %p192
      %p194 = pneg %p193
      // Predicated region
      $region9: #{tpu_custom_call.1} parent=5 // pred_check
        _
      $region10: #{tpu_custom_call.1} parent=5 // pred_check_branch
        %196 = sbr.rel (%p193) target = $region12
      $region11: #{tpu_custom_call.1} parent=5 // pred_region
        %s197 = ssub.s32 %s21, 1
        // Predicated region
        $region13: #{tpu_custom_call.1} parent=11 // pred_check
          %p198 = pneg %p94
        $region14: #{tpu_custom_call.1} parent=11 // pred_check_branch
          %200 = sbr.rel (%p198) target = $region16
        $region15: #{tpu_custom_call.1} parent=11 // pred_region
          _
        $region16: #{tpu_custom_call.1} parent=11 // pred_fallthru
          _
        // Predicated region
        $region17: #{tpu_custom_call.1} parent=11 // pred_check
          %p201 = pneg %p115
        $region18: #{tpu_custom_call.1} parent=11 // pred_check_branch
          %203 = sbr.rel (%p201) target = $region20
        $region19: #{tpu_custom_call.1} parent=11 // pred_region
          _
        $region20: #{tpu_custom_call.1} parent=11 // pred_fallthru
          _
        // Predicated region
        $region21: #{tpu_custom_call.1} parent=11 // pred_check
          %p204 = pneg %p136
        $region22: #{tpu_custom_call.1} parent=11 // pred_check_branch
          %206 = sbr.rel (%p204) target = $region24
        $region23: #{tpu_custom_call.1} parent=11 // pred_region
          _
        $region24: #{tpu_custom_call.1} parent=11 // pred_fallthru
          _
        // Predicated region
        $region25: #{tpu_custom_call.1} parent=11 // pred_check
          %p207 = pneg %p157
        $region26: #{tpu_custom_call.1} parent=11 // pred_check_branch
          %209 = sbr.rel (%p207) target = $region28
        $region27: #{tpu_custom_call.1} parent=11 // pred_region
          _
        $region28: #{tpu_custom_call.1} parent=11 // pred_fallthru
          _
      $region12: #{tpu_custom_call.1} parent=5 // pred_fallthru
        _
      %p210 = scmp.lt.s32.totalorder %s21, 2
      // Predicated region
      $region29: #{tpu_custom_call.1} parent=5 // pred_check
        %p211 = pneg %p210
      $region30: #{tpu_custom_call.1} parent=5 // pred_check_branch
        %213 = sbr.rel (%p211) target = $region32
      $region31: #{tpu_custom_call.1} parent=5 // pred_region
        // Predicated region
        $region33: #{tpu_custom_call.1} parent=31 // pred_check
          %p214 = pneg %p41
        $region34: #{tpu_custom_call.1} parent=31 // pred_check_branch
          %216 = sbr.rel (%p214) target = $region36
        $region35: #{tpu_custom_call.1} parent=31 // pred_region
          %s217 = sand.u32 %s31, 1
          %s218 = scalar_lea.sflag [#allocation3], %s217
          %s219 = sand.u32 %s31, 1
          %s220 = smul.addr %s219, 256
          %s221 = scalar_lea.vmem [#allocation2], %s220
          %223 = vsyncadd %s218, 0
          %s224 = smul.addr %s21, 32
          %s225 = smul.addr %s224, 8
          %s226 = scalar_lea.hbm %s0, %s225
          %s227 = sshll.u32 %s226, 4
          %s228 = int_to_ptr.hbm [resolvable:$true] %s227
          %s229 = sshll.u32 %s221, 4
          %s230 = int_to_ptr.vmem [resolvable:$true] %s229
          %235 = dma.hbm_to_vmem [thread:$0]  %s228, 4096, %s230, %s218, 256, 256, 16
        $region36: #{tpu_custom_call.1} parent=31 // pred_fallthru
          _
        // Predicated region
        $region37: #{tpu_custom_call.1} parent=31 // pred_check
          %p236 = pneg %p67
        $region38: #{tpu_custom_call.1} parent=31 // pred_check_branch
          %238 = sbr.rel (%p236) target = $region40
        $region39: #{tpu_custom_call.1} parent=31 // pred_region
          %s239 = sand.u32 %s57, 1
          %s240 = scalar_lea.sflag [#allocation6], %s239
          %s241 = sand.u32 %s57, 1
          %s242 = smul.addr %s241, 256
          %s243 = scalar_lea.vmem [#allocation5], %s242
          %245 = vsyncadd %s240, 0
          %s246 = smul.addr %s21, 32
          %s247 = smul.addr %s246, 8
          %s248 = scalar_lea.hbm %s1, %s247
          %s249 = sshll.u32 %s248, 4
          %s250 = int_to_ptr.hbm [resolvable:$true] %s249
          %s251 = sshll.u32 %s243, 4
          %s252 = int_to_ptr.vmem [resolvable:$true] %s251
          %257 = dma.hbm_to_vmem [thread:$0]  %s250, 4096, %s252, %s240, 256, 256, 16
        $region40: #{tpu_custom_call.1} parent=31 // pred_fallthru
          _
      $region32: #{tpu_custom_call.1} parent=5 // pred_fallthru
        _
      %p258 = scmp.le.s32.totalorder 1, %s21
      %p259 = scmp.lt.s32.totalorder %s21, 3
      %p260 = pnand %p258, %p259
      %p261 = pneg %p260
      // Predicated region
      $region41: #{tpu_custom_call.1} parent=5 // pred_check
        _
      $region42: #{tpu_custom_call.1} parent=5 // pred_check_branch
        %263 = sbr.rel (%p260) target = $region44
      $region43: #{tpu_custom_call.1} parent=5 // pred_region
        %s264 = ssub.s32 %s21, 1
        %s265 = sand.u32 %s34, 1
        %s266 = scalar_lea.sflag [#allocation3], %s265
        %s267 = sand.u32 %s34, 1
        %s268 = smul.addr %s267, 256
        %s269 = scalar_lea.vmem [#allocation2], %s268
        // Predicated region
        $region45: #{tpu_custom_call.1} parent=43 // pred_check
          %p270 = pneg %p47
        $region46: #{tpu_custom_call.1} parent=43 // pred_check_branch
          %272 = sbr.rel (%p270) target = $region48
        $region47: #{tpu_custom_call.1} parent=43 // pred_region
          %274 = dma.done %s266, 4096
        $region48: #{tpu_custom_call.1} parent=43 // pred_fallthru
          _
        %s275 = sand.u32 %s60, 1
        %s276 = scalar_lea.sflag [#allocation6], %s275
        %s277 = sand.u32 %s60, 1
        %s278 = smul.addr %s277, 256
        %s279 = scalar_lea.vmem [#allocation5], %s278
        // Predicated region
        $region49: #{tpu_custom_call.1} parent=43 // pred_check
          %p280 = pneg %p73
        $region50: #{tpu_custom_call.1} parent=43 // pred_check_branch
          %282 = sbr.rel (%p280) target = $region52
        $region51: #{tpu_custom_call.1} parent=43 // pred_region
          %284 = dma.done %s276, 4096
        $region52: #{tpu_custom_call.1} parent=43 // pred_fallthru
          _
        %s285 = sand.u32 %s34, 1
        %s286 = scalar_lea.sflag [#allocation3], %s285
        %s287 = sand.u32 %s34, 1
        %s288 = smul.addr %s287, 256
        %s289 = scalar_lea.vmem [#allocation2], %s288
        %p290 = pneg %p47
        %p291 = pneg %p44
        %s292 = sand.u32 %s60, 1
        %s293 = scalar_lea.sflag [#allocation6], %s292
        %s294 = sand.u32 %s60, 1
        %s295 = smul.addr %s294, 256
        %s296 = scalar_lea.vmem [#allocation5], %s295
        %p297 = pneg %p73
        %p298 = pneg %p70
        %p299 = pneg %p94
        %p300 = pneg %p91
        %p301 = pneg %p115
        %p302 = pneg %p112
        %p303 = pneg %p136
        %p304 = pneg %p133
        %p305 = pneg %p157
        %p306 = pneg %p154
        %p307 = pneg %p183
        %p308 = pneg %p180
        %s309 = sand.u32 %s170, 1
        %s310 = scalar_lea.sflag [#allocation4], %s309
        %s311 = sand.u32 %s170, 1
        %s312 = smul.addr %s311, 256
        %s313 = scalar_lea.vmem [#allocation7], %s312
        %v314 = vld [vmem:[%s269] sm:$0xff]
        %v315 = vld [vmem:[%s269 + $0x8] sm:$0xff]
        %v316 = vld [vmem:[%s269 + $0x10] sm:$0xff]
        %v317 = vld [vmem:[%s269 + $0x18] sm:$0xff]
        %v318 = vld [vmem:[%s269 + $0x20] sm:$0xff]
        %v319 = vld [vmem:[%s269 + $0x28] sm:$0xff]
        %v320 = vld [vmem:[%s269 + $0x30] sm:$0xff]
        %v321 = vld [vmem:[%s269 + $0x38] sm:$0xff]
        %v322 = vld [vmem:[%s269 + $0x40] sm:$0xff]
        %v323 = vld [vmem:[%s269 + $0x48] sm:$0xff]
        %v324 = vld [vmem:[%s269 + $0x50] sm:$0xff]
        %v325 = vld [vmem:[%s269 + $0x58] sm:$0xff]
        %v326 = vld [vmem:[%s269 + $0x60] sm:$0xff]
        %v327 = vld [vmem:[%s269 + $0x68] sm:$0xff]
        %v328 = vld [vmem:[%s269 + $0x70] sm:$0xff]
        %v329 = vld [vmem:[%s269 + $0x78] sm:$0xff]
        %v330 = vld [vmem:[%s269 + $0x80] sm:$0xff]
        %v331 = vld [vmem:[%s269 + $0x88] sm:$0xff]
        %v332 = vld [vmem:[%s269 + $0x90] sm:$0xff]
        %v333 = vld [vmem:[%s269 + $0x98] sm:$0xff]
        %v334 = vld [vmem:[%s269 + $0xa0] sm:$0xff]
        %v335 = vld [vmem:[%s269 + $0xa8] sm:$0xff]
        %v336 = vld [vmem:[%s269 + $0xb0] sm:$0xff]
        %v337 = vld [vmem:[%s269 + $0xb8] sm:$0xff]
        %v338 = vld [vmem:[%s269 + $0xc0] sm:$0xff]
        %v339 = vld [vmem:[%s269 + $0xc8] sm:$0xff]
        %v340 = vld [vmem:[%s269 + $0xd0] sm:$0xff]
        %v341 = vld [vmem:[%s269 + $0xd8] sm:$0xff]
        %v342 = vld [vmem:[%s269 + $0xe0] sm:$0xff]
        %v343 = vld [vmem:[%s269 + $0xe8] sm:$0xff]
        %v344 = vld [vmem:[%s269 + $0xf0] sm:$0xff]
        %v345 = vld [vmem:[%s269 + $0xf8] sm:$0xff]
        %v346 = vld [vmem:[%s279] sm:$0xff]
        %v347 = vld [vmem:[%s279 + $0x8] sm:$0xff]
        %v348 = vld [vmem:[%s279 + $0x10] sm:$0xff]
        %v349 = vld [vmem:[%s279 + $0x18] sm:$0xff]
        %v350 = vld [vmem:[%s279 + $0x20] sm:$0xff]
        %v351 = vld [vmem:[%s279 + $0x28] sm:$0xff]
        %v352 = vld [vmem:[%s279 + $0x30] sm:$0xff]
        %v353 = vld [vmem:[%s279 + $0x38] sm:$0xff]
        %v354 = vld [vmem:[%s279 + $0x40] sm:$0xff]
        %v355 = vld [vmem:[%s279 + $0x48] sm:$0xff]
        %v356 = vld [vmem:[%s279 + $0x50] sm:$0xff]
        %v357 = vld [vmem:[%s279 + $0x58] sm:$0xff]
        %v358 = vld [vmem:[%s279 + $0x60] sm:$0xff]
        %v359 = vld [vmem:[%s279 + $0x68] sm:$0xff]
        %v360 = vld [vmem:[%s279 + $0x70] sm:$0xff]
        %v361 = vld [vmem:[%s279 + $0x78] sm:$0xff]
        %v362 = vld [vmem:[%s279 + $0x80] sm:$0xff]
        %v363 = vld [vmem:[%s279 + $0x88] sm:$0xff]
        %v364 = vld [vmem:[%s279 + $0x90] sm:$0xff]
        %v365 = vld [vmem:[%s279 + $0x98] sm:$0xff]
        %v366 = vld [vmem:[%s279 + $0xa0] sm:$0xff]
        %v367 = vld [vmem:[%s279 + $0xa8] sm:$0xff]
        %v368 = vld [vmem:[%s279 + $0xb0] sm:$0xff]
        %v369 = vld [vmem:[%s279 + $0xb8] sm:$0xff]
        %v370 = vld [vmem:[%s279 + $0xc0] sm:$0xff]
        %v371 = vld [vmem:[%s279 + $0xc8] sm:$0xff]
        %v372 = vld [vmem:[%s279 + $0xd0] sm:$0xff]
        %v373 = vld [vmem:[%s279 + $0xd8] sm:$0xff]
        %v374 = vld [vmem:[%s279 + $0xe0] sm:$0xff]
        %v375 = vld [vmem:[%s279 + $0xe8] sm:$0xff]
        %v376 = vld [vmem:[%s279 + $0xf0] sm:$0xff]
        %v377 = vld [vmem:[%s279 + $0xf8] sm:$0xff]
        %v378 = vadd.f32 %v314, %v315
        %379 = vadd.xlane.f32.xlu0 %v378
        %v380 = vpop.xlane.xlu0 %379
        %v381 = vadd.f32 %v316, %v317
        %382 = vadd.xlane.f32.xlu0 %v381
        %v383 = vpop.xlane.xlu0 %382
        %v384 = vadd.f32 %v318, %v319
        %385 = vadd.xlane.f32.xlu0 %v384
        %v386 = vpop.xlane.xlu0 %385
        %v387 = vadd.f32 %v320, %v321
        %388 = vadd.xlane.f32.xlu0 %v387
        %v389 = vpop.xlane.xlu0 %388
        %v390 = vadd.f32 %v322, %v323
        %391 = vadd.xlane.f32.xlu0 %v390
        %v392 = vpop.xlane.xlu0 %391
        %v393 = vadd.f32 %v324, %v325
        %394 = vadd.xlane.f32.xlu0 %v393
        %v395 = vpop.xlane.xlu0 %394
        %v396 = vadd.f32 %v326, %v327
        %397 = vadd.xlane.f32.xlu0 %v396
        %v398 = vpop.xlane.xlu0 %397
        %v399 = vadd.f32 %v328, %v329
        %400 = vadd.xlane.f32.xlu0 %v399
        %v401 = vpop.xlane.xlu0 %400
        %v402 = vadd.f32 %v330, %v331
        %403 = vadd.xlane.f32.xlu0 %v402
        %v404 = vpop.xlane.xlu0 %403
        %v405 = vadd.f32 %v332, %v333
        %406 = vadd.xlane.f32.xlu0 %v405
        %v407 = vpop.xlane.xlu0 %406
        %v408 = vadd.f32 %v334, %v335
        %409 = vadd.xlane.f32.xlu0 %v408
        %v410 = vpop.xlane.xlu0 %409
        %v411 = vadd.f32 %v336, %v337
        %412 = vadd.xlane.f32.xlu0 %v411
        %v413 = vpop.xlane.xlu0 %412
        %v414 = vadd.f32 %v338, %v339
        %415 = vadd.xlane.f32.xlu0 %v414
        %v416 = vpop.xlane.xlu0 %415
        %v417 = vadd.f32 %v340, %v341
        %418 = vadd.xlane.f32.xlu0 %v417
        %v419 = vpop.xlane.xlu0 %418
        %v420 = vadd.f32 %v342, %v343
        %421 = vadd.xlane.f32.xlu0 %v420
        %v422 = vpop.xlane.xlu0 %421
        %v423 = vadd.f32 %v344, %v345
        %424 = vadd.xlane.f32.xlu0 %v423
        %v425 = vpop.xlane.xlu0 %424
        %v426 = vmul.f32 %v314, %v314
        %v427 = vmul.f32 %v315, %v315
        %v428 = vmul.f32 %v316, %v316
        %v429 = vmul.f32 %v317, %v317
        %v430 = vmul.f32 %v318, %v318
        %v431 = vmul.f32 %v319, %v319
        %v432 = vmul.f32 %v320, %v320
        %v433 = vmul.f32 %v321, %v321
        %v434 = vmul.f32 %v322, %v322
        %v435 = vmul.f32 %v323, %v323
        %v436 = vmul.f32 %v324, %v324
        %v437 = vmul.f32 %v325, %v325
        %v438 = vmul.f32 %v326, %v326
        %v439 = vmul.f32 %v327, %v327
        %v440 = vmul.f32 %v328, %v328
        %v441 = vmul.f32 %v329, %v329
        %v442 = vmul.f32 %v330, %v330
        %v443 = vmul.f32 %v331, %v331
        %v444 = vmul.f32 %v332, %v332
        %v445 = vmul.f32 %v333, %v333
        %v446 = vmul.f32 %v334, %v334
        %v447 = vmul.f32 %v335, %v335
        %v448 = vmul.f32 %v336, %v336
        %v449 = vmul.f32 %v337, %v337
        %v450 = vmul.f32 %v338, %v338
        %v451 = vmul.f32 %v339, %v339
        %v452 = vmul.f32 %v340, %v340
        %v453 = vmul.f32 %v341, %v341
        %v454 = vmul.f32 %v342, %v342
        %v455 = vmul.f32 %v343, %v343
        %v456 = vmul.f32 %v344, %v344
        %v457 = vmul.f32 %v345, %v345
        %v458 = vadd.f32 %v426, %v427
        %459 = vadd.xlane.f32.xlu0 %v458
        %v460 = vpop.xlane.xlu0 %459
        %v461 = vadd.f32 %v428, %v429
        %462 = vadd.xlane.f32.xlu0 %v461
        %v463 = vpop.xlane.xlu0 %462
        %v464 = vadd.f32 %v430, %v431
        %465 = vadd.xlane.f32.xlu0 %v464
        %v466 = vpop.xlane.xlu0 %465
        %v467 = vadd.f32 %v432, %v433
        %468 = vadd.xlane.f32.xlu0 %v467
        %v469 = vpop.xlane.xlu0 %468
        %v470 = vadd.f32 %v434, %v435
        %471 = vadd.xlane.f32.xlu0 %v470
        %v472 = vpop.xlane.xlu0 %471
        %v473 = vadd.f32 %v436, %v437
        %474 = vadd.xlane.f32.xlu0 %v473
        %v475 = vpop.xlane.xlu0 %474
        %v476 = vadd.f32 %v438, %v439
        %477 = vadd.xlane.f32.xlu0 %v476
        %v478 = vpop.xlane.xlu0 %477
        %v479 = vadd.f32 %v440, %v441
        %480 = vadd.xlane.f32.xlu0 %v479
        %v481 = vpop.xlane.xlu0 %480
        %v482 = vadd.f32 %v442, %v443
        %483 = vadd.xlane.f32.xlu0 %v482
        %v484 = vpop.xlane.xlu0 %483
        %v485 = vadd.f32 %v444, %v445
        %486 = vadd.xlane.f32.xlu0 %v485
        %v487 = vpop.xlane.xlu0 %486
        %v488 = vadd.f32 %v446, %v447
        %489 = vadd.xlane.f32.xlu0 %v488
        %v490 = vpop.xlane.xlu0 %489
        %v491 = vadd.f32 %v448, %v449
        %492 = vadd.xlane.f32.xlu0 %v491
        %v493 = vpop.xlane.xlu0 %492
        %v494 = vadd.f32 %v450, %v451
        %495 = vadd.xlane.f32.xlu0 %v494
        %v496 = vpop.xlane.xlu0 %495
        %v497 = vadd.f32 %v452, %v453
        %498 = vadd.xlane.f32.xlu0 %v497
        %v499 = vpop.xlane.xlu0 %498
        %v500 = vadd.f32 %v454, %v455
        %501 = vadd.xlane.f32.xlu0 %v500
        %v502 = vpop.xlane.xlu0 %501
        %v503 = vadd.f32 %v456, %v457
        %504 = vadd.xlane.f32.xlu0 %v503
        %v505 = vpop.xlane.xlu0 %504
        %v506 = vmul.f32 %v380, 0.00390625
        %v507 = vmul.f32 %v383, 0.00390625
        %v508 = vmul.f32 %v386, 0.00390625
        %v509 = vmul.f32 %v389, 0.00390625
        %v510 = vmul.f32 %v392, 0.00390625
        %v511 = vmul.f32 %v395, 0.00390625
        %v512 = vmul.f32 %v398, 0.00390625
        %v513 = vmul.f32 %v401, 0.00390625
        %v514 = vmul.f32 %v404, 0.00390625
        %v515 = vmul.f32 %v407, 0.00390625
        %v516 = vmul.f32 %v410, 0.00390625
        %v517 = vmul.f32 %v413, 0.00390625
        %v518 = vmul.f32 %v416, 0.00390625
        %v519 = vmul.f32 %v419, 0.00390625
        %v520 = vmul.f32 %v422, 0.00390625
        %v521 = vmul.f32 %v425, 0.00390625
        %v522 = vmul.f32 %v380, %v506
        %v523 = vmul.f32 %v383, %v507
        %v524 = vmul.f32 %v386, %v508
        %v525 = vmul.f32 %v389, %v509
        %v526 = vmul.f32 %v392, %v510
        %v527 = vmul.f32 %v395, %v511
        %v528 = vmul.f32 %v398, %v512
        %v529 = vmul.f32 %v401, %v513
        %v530 = vmul.f32 %v404, %v514
        %v531 = vmul.f32 %v407, %v515
        %v532 = vmul.f32 %v410, %v516
        %v533 = vmul.f32 %v413, %v517
        %v534 = vmul.f32 %v416, %v518
        %v535 = vmul.f32 %v419, %v519
        %v536 = vmul.f32 %v422, %v520
        %v537 = vmul.f32 %v425, %v521
        %v538 = vsub.f32 %v460, %v522
        %v539 = vsub.f32 %v463, %v523
        %v540 = vsub.f32 %v466, %v524
        %v541 = vsub.f32 %v469, %v525
        %v542 = vsub.f32 %v472, %v526
        %v543 = vsub.f32 %v475, %v527
        %v544 = vsub.f32 %v478, %v528
        %v545 = vsub.f32 %v481, %v529
        %v546 = vsub.f32 %v484, %v530
        %v547 = vsub.f32 %v487, %v531
        %v548 = vsub.f32 %v490, %v532
        %v549 = vsub.f32 %v493, %v533
        %v550 = vsub.f32 %v496, %v534
        %v551 = vsub.f32 %v499, %v535
        %v552 = vsub.f32 %v502, %v536
        %v553 = vsub.f32 %v505, %v537
        %v554 = vmul.f32 %v538, 0.003921569
        %v555 = vmul.f32 %v539, 0.003921569
        %v556 = vmul.f32 %v540, 0.003921569
        %v557 = vmul.f32 %v541, 0.003921569
        %v558 = vmul.f32 %v542, 0.003921569
        %v559 = vmul.f32 %v543, 0.003921569
        %v560 = vmul.f32 %v544, 0.003921569
        %v561 = vmul.f32 %v545, 0.003921569
        %v562 = vmul.f32 %v546, 0.003921569
        %v563 = vmul.f32 %v547, 0.003921569
        %v564 = vmul.f32 %v548, 0.003921569
        %v565 = vmul.f32 %v549, 0.003921569
        %v566 = vmul.f32 %v550, 0.003921569
        %v567 = vmul.f32 %v551, 0.003921569
        %v568 = vmul.f32 %v552, 0.003921569
        %v569 = vmul.f32 %v553, 0.003921569
        %v570 = vadd.f32 %v554, 1e-05
        %v571 = vadd.f32 %v555, 1e-05
        %v572 = vadd.f32 %v556, 1e-05
        %v573 = vadd.f32 %v557, 1e-05
        %v574 = vadd.f32 %v558, 1e-05
        %v575 = vadd.f32 %v559, 1e-05
        %v576 = vadd.f32 %v560, 1e-05
        %v577 = vadd.f32 %v561, 1e-05
        %v578 = vadd.f32 %v562, 1e-05
        %v579 = vadd.f32 %v563, 1e-05
        %v580 = vadd.f32 %v564, 1e-05
        %v581 = vadd.f32 %v565, 1e-05
        %v582 = vadd.f32 %v566, 1e-05
        %v583 = vadd.f32 %v567, 1e-05
        %v584 = vadd.f32 %v568, 1e-05
        %v585 = vadd.f32 %v569, 1e-05
        %v586 = vrsqrt.pop %v570
        %v587 = vmul.f32 %v586, %v570
        %v588 = vmul.f32 %v587, %v586
        %v589 = vmul.f32 0.5, %v588
        %v590 = vsub.f32 1.5, %v589
        %v591 = vmul.f32 %v586, %v590
        %v592 = vmul.f32 %v570, %v591
        %vm593 = vcmp.eq.f32.partialorder %v570, inf
        %v594 = vsel %vm593, %v570, %v592
        %vm595 = vcmp.eq.f32.partialorder %v570, 0.0
        %v596 = vand.u32 %v570, 2147483648
        %v597 = vsel %vm595, %v596, %v594
        %v598 = vrsqrt.pop %v571
        %v599 = vmul.f32 %v598, %v571
        %v600 = vmul.f32 %v599, %v598
        %v601 = vmul.f32 0.5, %v600
        %v602 = vsub.f32 1.5, %v601
        %v603 = vmul.f32 %v598, %v602
        %v604 = vmul.f32 %v571, %v603
        %vm605 = vcmp.eq.f32.partialorder %v571, inf
        %v606 = vsel %vm605, %v571, %v604
        %vm607 = vcmp.eq.f32.partialorder %v571, 0.0
        %v608 = vand.u32 %v571, 2147483648
        %v609 = vsel %vm607, %v608, %v606
        %v610 = vrsqrt.pop %v572
        %v611 = vmul.f32 %v610, %v572
        %v612 = vmul.f32 %v611, %v610
        %v613 = vmul.f32 0.5, %v612
        %v614 = vsub.f32 1.5, %v613
        %v615 = vmul.f32 %v610, %v614
        %v616 = vmul.f32 %v572, %v615
        %vm617 = vcmp.eq.f32.partialorder %v572, inf
        %v618 = vsel %vm617, %v572, %v616
        %vm619 = vcmp.eq.f32.partialorder %v572, 0.0
        %v620 = vand.u32 %v572, 2147483648
        %v621 = vsel %vm619, %v620, %v618
        %v622 = vrsqrt.pop %v573
        %v623 = vmul.f32 %v622, %v573
        %v624 = vmul.f32 %v623, %v622
        %v625 = vmul.f32 0.5, %v624
        %v626 = vsub.f32 1.5, %v625
        %v627 = vmul.f32 %v622, %v626
        %v628 = vmul.f32 %v573, %v627
        %vm629 = vcmp.eq.f32.partialorder %v573, inf
        %v630 = vsel %vm629, %v573, %v628
        %vm631 = vcmp.eq.f32.partialorder %v573, 0.0
        %v632 = vand.u32 %v573, 2147483648
        %v633 = vsel %vm631, %v632, %v630
        %v634 = vrsqrt.pop %v574
        %v635 = vmul.f32 %v634, %v574
        %v636 = vmul.f32 %v635, %v634
        %v637 = vmul.f32 0.5, %v636
        %v638 = vsub.f32 1.5, %v637
        %v639 = vmul.f32 %v634, %v638
        %v640 = vmul.f32 %v574, %v639
        %vm641 = vcmp.eq.f32.partialorder %v574, inf
        %v642 = vsel %vm641, %v574, %v640
        %vm643 = vcmp.eq.f32.partialorder %v574, 0.0
        %v644 = vand.u32 %v574, 2147483648
        %v645 = vsel %vm643, %v644, %v642
        %v646 = vrsqrt.pop %v575
        %v647 = vmul.f32 %v646, %v575
        %v648 = vmul.f32 %v647, %v646
        %v649 = vmul.f32 0.5, %v648
        %v650 = vsub.f32 1.5, %v649
        %v651 = vmul.f32 %v646, %v650
        %v652 = vmul.f32 %v575, %v651
        %vm653 = vcmp.eq.f32.partialorder %v575, inf
        %v654 = vsel %vm653, %v575, %v652
        %vm655 = vcmp.eq.f32.partialorder %v575, 0.0
        %v656 = vand.u32 %v575, 2147483648
        %v657 = vsel %vm655, %v656, %v654
        %v658 = vrsqrt.pop %v576
        %v659 = vmul.f32 %v658, %v576
        %v660 = vmul.f32 %v659, %v658
        %v661 = vmul.f32 0.5, %v660
        %v662 = vsub.f32 1.5, %v661
        %v663 = vmul.f32 %v658, %v662
        %v664 = vmul.f32 %v576, %v663
        %vm665 = vcmp.eq.f32.partialorder %v576, inf
        %v666 = vsel %vm665, %v576, %v664
        %vm667 = vcmp.eq.f32.partialorder %v576, 0.0
        %v668 = vand.u32 %v576, 2147483648
        %v669 = vsel %vm667, %v668, %v666
        %v670 = vrsqrt.pop %v577
        %v671 = vmul.f32 %v670, %v577
        %v672 = vmul.f32 %v671, %v670
        %v673 = vmul.f32 0.5, %v672
        %v674 = vsub.f32 1.5, %v673
        %v675 = vmul.f32 %v670, %v674
        %v676 = vmul.f32 %v577, %v675
        %vm677 = vcmp.eq.f32.partialorder %v577, inf
        %v678 = vsel %vm677, %v577, %v676
        %vm679 = vcmp.eq.f32.partialorder %v577, 0.0
        %v680 = vand.u32 %v577, 2147483648
        %v681 = vsel %vm679, %v680, %v678
        %v682 = vrsqrt.pop %v578
        %v683 = vmul.f32 %v682, %v578
        %v684 = vmul.f32 %v683, %v682
        %v685 = vmul.f32 0.5, %v684
        %v686 = vsub.f32 1.5, %v685
        %v687 = vmul.f32 %v682, %v686
        %v688 = vmul.f32 %v578, %v687
        %vm689 = vcmp.eq.f32.partialorder %v578, inf
        %v690 = vsel %vm689, %v578, %v688
        %vm691 = vcmp.eq.f32.partialorder %v578, 0.0
        %v692 = vand.u32 %v578, 2147483648
        %v693 = vsel %vm691, %v692, %v690
        %v694 = vrsqrt.pop %v579
        %v695 = vmul.f32 %v694, %v579
        %v696 = vmul.f32 %v695, %v694
        %v697 = vmul.f32 0.5, %v696
        %v698 = vsub.f32 1.5, %v697
        %v699 = vmul.f32 %v694, %v698
        %v700 = vmul.f32 %v579, %v699
        %vm701 = vcmp.eq.f32.partialorder %v579, inf
        %v702 = vsel %vm701, %v579, %v700
        %vm703 = vcmp.eq.f32.partialorder %v579, 0.0
        %v704 = vand.u32 %v579, 2147483648
        %v705 = vsel %vm703, %v704, %v702
        %v706 = vrsqrt.pop %v580
        %v707 = vmul.f32 %v706, %v580
        %v708 = vmul.f32 %v707, %v706
        %v709 = vmul.f32 0.5, %v708
        %v710 = vsub.f32 1.5, %v709
        %v711 = vmul.f32 %v706, %v710
        %v712 = vmul.f32 %v580, %v711
        %vm713 = vcmp.eq.f32.partialorder %v580, inf
        %v714 = vsel %vm713, %v580, %v712
        %vm715 = vcmp.eq.f32.partialorder %v580, 0.0
        %v716 = vand.u32 %v580, 2147483648
        %v717 = vsel %vm715, %v716, %v714
        %v718 = vrsqrt.pop %v581
        %v719 = vmul.f32 %v718, %v581
        %v720 = vmul.f32 %v719, %v718
        %v721 = vmul.f32 0.5, %v720
        %v722 = vsub.f32 1.5, %v721
        %v723 = vmul.f32 %v718, %v722
        %v724 = vmul.f32 %v581, %v723
        %vm725 = vcmp.eq.f32.partialorder %v581, inf
        %v726 = vsel %vm725, %v581, %v724
        %vm727 = vcmp.eq.f32.partialorder %v581, 0.0
        %v728 = vand.u32 %v581, 2147483648
        %v729 = vsel %vm727, %v728, %v726
        %v730 = vrsqrt.pop %v582
        %v731 = vmul.f32 %v730, %v582
        %v732 = vmul.f32 %v731, %v730
        %v733 = vmul.f32 0.5, %v732
        %v734 = vsub.f32 1.5, %v733
        %v735 = vmul.f32 %v730, %v734
        %v736 = vmul.f32 %v582, %v735
        %vm737 = vcmp.eq.f32.partialorder %v582, inf
        %v738 = vsel %vm737, %v582, %v736
        %vm739 = vcmp.eq.f32.partialorder %v582, 0.0
        %v740 = vand.u32 %v582, 2147483648
        %v741 = vsel %vm739, %v740, %v738
        %v742 = vrsqrt.pop %v583
        %v743 = vmul.f32 %v742, %v583
        %v744 = vmul.f32 %v743, %v742
        %v745 = vmul.f32 0.5, %v744
        %v746 = vsub.f32 1.5, %v745
        %v747 = vmul.f32 %v742, %v746
        %v748 = vmul.f32 %v583, %v747
        %vm749 = vcmp.eq.f32.partialorder %v583, inf
        %v750 = vsel %vm749, %v583, %v748
        %vm751 = vcmp.eq.f32.partialorder %v583, 0.0
        %v752 = vand.u32 %v583, 2147483648
        %v753 = vsel %vm751, %v752, %v750
        %v754 = vrsqrt.pop %v584
        %v755 = vmul.f32 %v754, %v584
        %v756 = vmul.f32 %v755, %v754
        %v757 = vmul.f32 0.5, %v756
        %v758 = vsub.f32 1.5, %v757
        %v759 = vmul.f32 %v754, %v758
        %v760 = vmul.f32 %v584, %v759
        %vm761 = vcmp.eq.f32.partialorder %v584, inf
        %v762 = vsel %vm761, %v584, %v760
        %vm763 = vcmp.eq.f32.partialorder %v584, 0.0
        %v764 = vand.u32 %v584, 2147483648
        %v765 = vsel %vm763, %v764, %v762
        %v766 = vrsqrt.pop %v585
        %v767 = vmul.f32 %v766, %v585
        %v768 = vmul.f32 %v767, %v766
        %v769 = vmul.f32 0.5, %v768
        %v770 = vsub.f32 1.5, %v769
        %v771 = vmul.f32 %v766, %v770
        %v772 = vmul.f32 %v585, %v771
        %vm773 = vcmp.eq.f32.partialorder %v585, inf
        %v774 = vsel %vm773, %v585, %v772
        %vm775 = vcmp.eq.f32.partialorder %v585, 0.0
        %v776 = vand.u32 %v585, 2147483648
        %v777 = vsel %vm775, %v776, %v774
        %v778 = vadd.f32 %v346, %v347
        %779 = vadd.xlane.f32.xlu0 %v778
        %v780 = vpop.xlane.xlu0 %779
        %v781 = vadd.f32 %v348, %v349
        %782 = vadd.xlane.f32.xlu0 %v781
        %v783 = vpop.xlane.xlu0 %782
        %v784 = vadd.f32 %v350, %v351
        %785 = vadd.xlane.f32.xlu0 %v784
        %v786 = vpop.xlane.xlu0 %785
        %v787 = vadd.f32 %v352, %v353
        %788 = vadd.xlane.f32.xlu0 %v787
        %v789 = vpop.xlane.xlu0 %788
        %v790 = vadd.f32 %v354, %v355
        %791 = vadd.xlane.f32.xlu0 %v790
        %v792 = vpop.xlane.xlu0 %791
        %v793 = vadd.f32 %v356, %v357
        %794 = vadd.xlane.f32.xlu0 %v793
        %v795 = vpop.xlane.xlu0 %794
        %v796 = vadd.f32 %v358, %v359
        %797 = vadd.xlane.f32.xlu0 %v796
        %v798 = vpop.xlane.xlu0 %797
        %v799 = vadd.f32 %v360, %v361
        %800 = vadd.xlane.f32.xlu0 %v799
        %v801 = vpop.xlane.xlu0 %800
        %v802 = vadd.f32 %v362, %v363
        %803 = vadd.xlane.f32.xlu0 %v802
        %v804 = vpop.xlane.xlu0 %803
        %v805 = vadd.f32 %v364, %v365
        %806 = vadd.xlane.f32.xlu0 %v805
        %v807 = vpop.xlane.xlu0 %806
        %v808 = vadd.f32 %v366, %v367
        %809 = vadd.xlane.f32.xlu0 %v808
        %v810 = vpop.xlane.xlu0 %809
        %v811 = vadd.f32 %v368, %v369
        %812 = vadd.xlane.f32.xlu0 %v811
        %v813 = vpop.xlane.xlu0 %812
        %v814 = vadd.f32 %v370, %v371
        %815 = vadd.xlane.f32.xlu0 %v814
        %v816 = vpop.xlane.xlu0 %815
        %v817 = vadd.f32 %v372, %v373
        %818 = vadd.xlane.f32.xlu0 %v817
        %v819 = vpop.xlane.xlu0 %818
        %v820 = vadd.f32 %v374, %v375
        %821 = vadd.xlane.f32.xlu0 %v820
        %v822 = vpop.xlane.xlu0 %821
        %v823 = vadd.f32 %v376, %v377
        %824 = vadd.xlane.f32.xlu0 %v823
        %v825 = vpop.xlane.xlu0 %824
        %v826 = vmul.f32 %v346, %v346
        %v827 = vmul.f32 %v347, %v347
        %v828 = vmul.f32 %v348, %v348
        %v829 = vmul.f32 %v349, %v349
        %v830 = vmul.f32 %v350, %v350
        %v831 = vmul.f32 %v351, %v351
        %v832 = vmul.f32 %v352, %v352
        %v833 = vmul.f32 %v353, %v353
        %v834 = vmul.f32 %v354, %v354
        %v835 = vmul.f32 %v355, %v355
        %v836 = vmul.f32 %v356, %v356
        %v837 = vmul.f32 %v357, %v357
        %v838 = vmul.f32 %v358, %v358
        %v839 = vmul.f32 %v359, %v359
        %v840 = vmul.f32 %v360, %v360
        %v841 = vmul.f32 %v361, %v361
        %v842 = vmul.f32 %v362, %v362
        %v843 = vmul.f32 %v363, %v363
        %v844 = vmul.f32 %v364, %v364
        %v845 = vmul.f32 %v365, %v365
        %v846 = vmul.f32 %v366, %v366
        %v847 = vmul.f32 %v367, %v367
        %v848 = vmul.f32 %v368, %v368
        %v849 = vmul.f32 %v369, %v369
        %v850 = vmul.f32 %v370, %v370
        %v851 = vmul.f32 %v371, %v371
        %v852 = vmul.f32 %v372, %v372
        %v853 = vmul.f32 %v373, %v373
        %v854 = vmul.f32 %v374, %v374
        %v855 = vmul.f32 %v375, %v375
        %v856 = vmul.f32 %v376, %v376
        %v857 = vmul.f32 %v377, %v377
        %v858 = vadd.f32 %v826, %v827
        %859 = vadd.xlane.f32.xlu0 %v858
        %v860 = vpop.xlane.xlu0 %859
        %v861 = vadd.f32 %v828, %v829
        %862 = vadd.xlane.f32.xlu0 %v861
        %v863 = vpop.xlane.xlu0 %862
        %v864 = vadd.f32 %v830, %v831
        %865 = vadd.xlane.f32.xlu0 %v864
        %v866 = vpop.xlane.xlu0 %865
        %v867 = vadd.f32 %v832, %v833
        %868 = vadd.xlane.f32.xlu0 %v867
        %v869 = vpop.xlane.xlu0 %868
        %v870 = vadd.f32 %v834, %v835
        %871 = vadd.xlane.f32.xlu0 %v870
        %v872 = vpop.xlane.xlu0 %871
        %v873 = vadd.f32 %v836, %v837
        %874 = vadd.xlane.f32.xlu0 %v873
        %v875 = vpop.xlane.xlu0 %874
        %v876 = vadd.f32 %v838, %v839
        %877 = vadd.xlane.f32.xlu0 %v876
        %v878 = vpop.xlane.xlu0 %877
        %v879 = vadd.f32 %v840, %v841
        %880 = vadd.xlane.f32.xlu0 %v879
        %v881 = vpop.xlane.xlu0 %880
        %v882 = vadd.f32 %v842, %v843
        %883 = vadd.xlane.f32.xlu0 %v882
        %v884 = vpop.xlane.xlu0 %883
        %v885 = vadd.f32 %v844, %v845
        %886 = vadd.xlane.f32.xlu0 %v885
        %v887 = vpop.xlane.xlu0 %886
        %v888 = vadd.f32 %v846, %v847
        %889 = vadd.xlane.f32.xlu0 %v888
        %v890 = vpop.xlane.xlu0 %889
        %v891 = vadd.f32 %v848, %v849
        %892 = vadd.xlane.f32.xlu0 %v891
        %v893 = vpop.xlane.xlu0 %892
        %v894 = vadd.f32 %v850, %v851
        %895 = vadd.xlane.f32.xlu0 %v894
        %v896 = vpop.xlane.xlu0 %895
        %v897 = vadd.f32 %v852, %v853
        %898 = vadd.xlane.f32.xlu0 %v897
        %v899 = vpop.xlane.xlu0 %898
        %v900 = vadd.f32 %v854, %v855
        %901 = vadd.xlane.f32.xlu0 %v900
        %v902 = vpop.xlane.xlu0 %901
        %v903 = vadd.f32 %v856, %v857
        %904 = vadd.xlane.f32.xlu0 %v903
        %v905 = vpop.xlane.xlu0 %904
        %v906 = vmul.f32 %v780, 0.00390625
        %v907 = vmul.f32 %v783, 0.00390625
        %v908 = vmul.f32 %v786, 0.00390625
        %v909 = vmul.f32 %v789, 0.00390625
        %v910 = vmul.f32 %v792, 0.00390625
        %v911 = vmul.f32 %v795, 0.00390625
        %v912 = vmul.f32 %v798, 0.00390625
        %v913 = vmul.f32 %v801, 0.00390625
        %v914 = vmul.f32 %v804, 0.00390625
        %v915 = vmul.f32 %v807, 0.00390625
        %v916 = vmul.f32 %v810, 0.00390625
        %v917 = vmul.f32 %v813, 0.00390625
        %v918 = vmul.f32 %v816, 0.00390625
        %v919 = vmul.f32 %v819, 0.00390625
        %v920 = vmul.f32 %v822, 0.00390625
        %v921 = vmul.f32 %v825, 0.00390625
        %v922 = vmul.f32 %v780, %v906
        %v923 = vmul.f32 %v783, %v907
        %v924 = vmul.f32 %v786, %v908
        %v925 = vmul.f32 %v789, %v909
        %v926 = vmul.f32 %v792, %v910
        %v927 = vmul.f32 %v795, %v911
        %v928 = vmul.f32 %v798, %v912
        %v929 = vmul.f32 %v801, %v913
        %v930 = vmul.f32 %v804, %v914
        %v931 = vmul.f32 %v807, %v915
        %v932 = vmul.f32 %v810, %v916
        %v933 = vmul.f32 %v813, %v917
        %v934 = vmul.f32 %v816, %v918
        %v935 = vmul.f32 %v819, %v919
        %v936 = vmul.f32 %v822, %v920
        %v937 = vmul.f32 %v825, %v921
        %v938 = vsub.f32 %v860, %v922
        %v939 = vsub.f32 %v863, %v923
        %v940 = vsub.f32 %v866, %v924
        %v941 = vsub.f32 %v869, %v925
        %v942 = vsub.f32 %v872, %v926
        %v943 = vsub.f32 %v875, %v927
        %v944 = vsub.f32 %v878, %v928
        %v945 = vsub.f32 %v881, %v929
        %v946 = vsub.f32 %v884, %v930
        %v947 = vsub.f32 %v887, %v931
        %v948 = vsub.f32 %v890, %v932
        %v949 = vsub.f32 %v893, %v933
        %v950 = vsub.f32 %v896, %v934
        %v951 = vsub.f32 %v899, %v935
        %v952 = vsub.f32 %v902, %v936
        %v953 = vsub.f32 %v905, %v937
        %v954 = vmul.f32 %v938, 0.003921569
        %v955 = vmul.f32 %v939, 0.003921569
        %v956 = vmul.f32 %v940, 0.003921569
        %v957 = vmul.f32 %v941, 0.003921569
        %v958 = vmul.f32 %v942, 0.003921569
        %v959 = vmul.f32 %v943, 0.003921569
        %v960 = vmul.f32 %v944, 0.003921569
        %v961 = vmul.f32 %v945, 0.003921569
        %v962 = vmul.f32 %v946, 0.003921569
        %v963 = vmul.f32 %v947, 0.003921569
        %v964 = vmul.f32 %v948, 0.003921569
        %v965 = vmul.f32 %v949, 0.003921569
        %v966 = vmul.f32 %v950, 0.003921569
        %v967 = vmul.f32 %v951, 0.003921569
        %v968 = vmul.f32 %v952, 0.003921569
        %v969 = vmul.f32 %v953, 0.003921569
        %v970 = vadd.f32 %v954, 1e-05
        %v971 = vadd.f32 %v955, 1e-05
        %v972 = vadd.f32 %v956, 1e-05
        %v973 = vadd.f32 %v957, 1e-05
        %v974 = vadd.f32 %v958, 1e-05
        %v975 = vadd.f32 %v959, 1e-05
        %v976 = vadd.f32 %v960, 1e-05
        %v977 = vadd.f32 %v961, 1e-05
        %v978 = vadd.f32 %v962, 1e-05
        %v979 = vadd.f32 %v963, 1e-05
        %v980 = vadd.f32 %v964, 1e-05
        %v981 = vadd.f32 %v965, 1e-05
        %v982 = vadd.f32 %v966, 1e-05
        %v983 = vadd.f32 %v967, 1e-05
        %v984 = vadd.f32 %v968, 1e-05
        %v985 = vadd.f32 %v969, 1e-05
        %v986 = vrsqrt.pop %v970
        %v987 = vmul.f32 %v986, %v970
        %v988 = vmul.f32 %v987, %v986
        %v989 = vmul.f32 0.5, %v988
        %v990 = vsub.f32 1.5, %v989
        %v991 = vmul.f32 %v986, %v990
        %v992 = vmul.f32 %v970, %v991
        %vm993 = vcmp.eq.f32.partialorder %v970, inf
        %v994 = vsel %vm993, %v970, %v992
        %vm995 = vcmp.eq.f32.partialorder %v970, 0.0
        %v996 = vand.u32 %v970, 2147483648
        %v997 = vsel %vm995, %v996, %v994
        %v998 = vrsqrt.pop %v971
        %v999 = vmul.f32 %v998, %v971
        %v1000 = vmul.f32 %v999, %v998
        %v1001 = vmul.f32 0.5, %v1000
        %v1002 = vsub.f32 1.5, %v1001
        %v1003 = vmul.f32 %v998, %v1002
        %v1004 = vmul.f32 %v971, %v1003
        %vm1005 = vcmp.eq.f32.partialorder %v971, inf
        %v1006 = vsel %vm1005, %v971, %v1004
        %vm1007 = vcmp.eq.f32.partialorder %v971, 0.0
        %v1008 = vand.u32 %v971, 2147483648
        %v1009 = vsel %vm1007, %v1008, %v1006
        %v1010 = vrsqrt.pop %v972
        %v1011 = vmul.f32 %v1010, %v972
        %v1012 = vmul.f32 %v1011, %v1010
        %v1013 = vmul.f32 0.5, %v1012
        %v1014 = vsub.f32 1.5, %v1013
        %v1015 = vmul.f32 %v1010, %v1014
        %v1016 = vmul.f32 %v972, %v1015
        %vm1017 = vcmp.eq.f32.partialorder %v972, inf
        %v1018 = vsel %vm1017, %v972, %v1016
        %vm1019 = vcmp.eq.f32.partialorder %v972, 0.0
        %v1020 = vand.u32 %v972, 2147483648
        %v1021 = vsel %vm1019, %v1020, %v1018
        %v1022 = vrsqrt.pop %v973
        %v1023 = vmul.f32 %v1022, %v973
        %v1024 = vmul.f32 %v1023, %v1022
        %v1025 = vmul.f32 0.5, %v1024
        %v1026 = vsub.f32 1.5, %v1025
        %v1027 = vmul.f32 %v1022, %v1026
        %v1028 = vmul.f32 %v973, %v1027
        %vm1029 = vcmp.eq.f32.partialorder %v973, inf
        %v1030 = vsel %vm1029, %v973, %v1028
        %vm1031 = vcmp.eq.f32.partialorder %v973, 0.0
        %v1032 = vand.u32 %v973, 2147483648
        %v1033 = vsel %vm1031, %v1032, %v1030
        %v1034 = vrsqrt.pop %v974
        %v1035 = vmul.f32 %v1034, %v974
        %v1036 = vmul.f32 %v1035, %v1034
        %v1037 = vmul.f32 0.5, %v1036
        %v1038 = vsub.f32 1.5, %v1037
        %v1039 = vmul.f32 %v1034, %v1038
        %v1040 = vmul.f32 %v974, %v1039
        %vm1041 = vcmp.eq.f32.partialorder %v974, inf
        %v1042 = vsel %vm1041, %v974, %v1040
        %vm1043 = vcmp.eq.f32.partialorder %v974, 0.0
        %v1044 = vand.u32 %v974, 2147483648
        %v1045 = vsel %vm1043, %v1044, %v1042
        %v1046 = vrsqrt.pop %v975
        %v1047 = vmul.f32 %v1046, %v975
        %v1048 = vmul.f32 %v1047, %v1046
        %v1049 = vmul.f32 0.5, %v1048
        %v1050 = vsub.f32 1.5, %v1049
        %v1051 = vmul.f32 %v1046, %v1050
        %v1052 = vmul.f32 %v975, %v1051
        %vm1053 = vcmp.eq.f32.partialorder %v975, inf
        %v1054 = vsel %vm1053, %v975, %v1052
        %vm1055 = vcmp.eq.f32.partialorder %v975, 0.0
        %v1056 = vand.u32 %v975, 2147483648
        %v1057 = vsel %vm1055, %v1056, %v1054
        %v1058 = vrsqrt.pop %v976
        %v1059 = vmul.f32 %v1058, %v976
        %v1060 = vmul.f32 %v1059, %v1058
        %v1061 = vmul.f32 0.5, %v1060
        %v1062 = vsub.f32 1.5, %v1061
        %v1063 = vmul.f32 %v1058, %v1062
        %v1064 = vmul.f32 %v976, %v1063
        %vm1065 = vcmp.eq.f32.partialorder %v976, inf
        %v1066 = vsel %vm1065, %v976, %v1064
        %vm1067 = vcmp.eq.f32.partialorder %v976, 0.0
        %v1068 = vand.u32 %v976, 2147483648
        %v1069 = vsel %vm1067, %v1068, %v1066
        %v1070 = vrsqrt.pop %v977
        %v1071 = vmul.f32 %v1070, %v977
        %v1072 = vmul.f32 %v1071, %v1070
        %v1073 = vmul.f32 0.5, %v1072
        %v1074 = vsub.f32 1.5, %v1073
        %v1075 = vmul.f32 %v1070, %v1074
        %v1076 = vmul.f32 %v977, %v1075
        %vm1077 = vcmp.eq.f32.partialorder %v977, inf
        %v1078 = vsel %vm1077, %v977, %v1076
        %vm1079 = vcmp.eq.f32.partialorder %v977, 0.0
        %v1080 = vand.u32 %v977, 2147483648
        %v1081 = vsel %vm1079, %v1080, %v1078
        %v1082 = vrsqrt.pop %v978
        %v1083 = vmul.f32 %v1082, %v978
        %v1084 = vmul.f32 %v1083, %v1082
        %v1085 = vmul.f32 0.5, %v1084
        %v1086 = vsub.f32 1.5, %v1085
        %v1087 = vmul.f32 %v1082, %v1086
        %v1088 = vmul.f32 %v978, %v1087
        %vm1089 = vcmp.eq.f32.partialorder %v978, inf
        %v1090 = vsel %vm1089, %v978, %v1088
        %vm1091 = vcmp.eq.f32.partialorder %v978, 0.0
        %v1092 = vand.u32 %v978, 2147483648
        %v1093 = vsel %vm1091, %v1092, %v1090
        %v1094 = vrsqrt.pop %v979
        %v1095 = vmul.f32 %v1094, %v979
        %v1096 = vmul.f32 %v1095, %v1094
        %v1097 = vmul.f32 0.5, %v1096
        %v1098 = vsub.f32 1.5, %v1097
        %v1099 = vmul.f32 %v1094, %v1098
        %v1100 = vmul.f32 %v979, %v1099
        %vm1101 = vcmp.eq.f32.partialorder %v979, inf
        %v1102 = vsel %vm1101, %v979, %v1100
        %vm1103 = vcmp.eq.f32.partialorder %v979, 0.0
        %v1104 = vand.u32 %v979, 2147483648
        %v1105 = vsel %vm1103, %v1104, %v1102
        %v1106 = vrsqrt.pop %v980
        %v1107 = vmul.f32 %v1106, %v980
        %v1108 = vmul.f32 %v1107, %v1106
        %v1109 = vmul.f32 0.5, %v1108
        %v1110 = vsub.f32 1.5, %v1109
        %v1111 = vmul.f32 %v1106, %v1110
        %v1112 = vmul.f32 %v980, %v1111
        %vm1113 = vcmp.eq.f32.partialorder %v980, inf
        %v1114 = vsel %vm1113, %v980, %v1112
        %vm1115 = vcmp.eq.f32.partialorder %v980, 0.0
        %v1116 = vand.u32 %v980, 2147483648
        %v1117 = vsel %vm1115, %v1116, %v1114
        %v1118 = vrsqrt.pop %v981
        %v1119 = vmul.f32 %v1118, %v981
        %v1120 = vmul.f32 %v1119, %v1118
        %v1121 = vmul.f32 0.5, %v1120
        %v1122 = vsub.f32 1.5, %v1121
        %v1123 = vmul.f32 %v1118, %v1122
        %v1124 = vmul.f32 %v981, %v1123
        %vm1125 = vcmp.eq.f32.partialorder %v981, inf
        %v1126 = vsel %vm1125, %v981, %v1124
        %vm1127 = vcmp.eq.f32.partialorder %v981, 0.0
        %v1128 = vand.u32 %v981, 2147483648
        %v1129 = vsel %vm1127, %v1128, %v1126
        %v1130 = vrsqrt.pop %v982
        %v1131 = vmul.f32 %v1130, %v982
        %v1132 = vmul.f32 %v1131, %v1130
        %v1133 = vmul.f32 0.5, %v1132
        %v1134 = vsub.f32 1.5, %v1133
        %v1135 = vmul.f32 %v1130, %v1134
        %v1136 = vmul.f32 %v982, %v1135
        %vm1137 = vcmp.eq.f32.partialorder %v982, inf
        %v1138 = vsel %vm1137, %v982, %v1136
        %vm1139 = vcmp.eq.f32.partialorder %v982, 0.0
        %v1140 = vand.u32 %v982, 2147483648
        %v1141 = vsel %vm1139, %v1140, %v1138
        %v1142 = vrsqrt.pop %v983
        %v1143 = vmul.f32 %v1142, %v983
        %v1144 = vmul.f32 %v1143, %v1142
        %v1145 = vmul.f32 0.5, %v1144
        %v1146 = vsub.f32 1.5, %v1145
        %v1147 = vmul.f32 %v1142, %v1146
        %v1148 = vmul.f32 %v983, %v1147
        %vm1149 = vcmp.eq.f32.partialorder %v983, inf
        %v1150 = vsel %vm1149, %v983, %v1148
        %vm1151 = vcmp.eq.f32.partialorder %v983, 0.0
        %v1152 = vand.u32 %v983, 2147483648
        %v1153 = vsel %vm1151, %v1152, %v1150
        %v1154 = vrsqrt.pop %v984
        %v1155 = vmul.f32 %v1154, %v984
        %v1156 = vmul.f32 %v1155, %v1154
        %v1157 = vmul.f32 0.5, %v1156
        %v1158 = vsub.f32 1.5, %v1157
        %v1159 = vmul.f32 %v1154, %v1158
        %v1160 = vmul.f32 %v984, %v1159
        %vm1161 = vcmp.eq.f32.partialorder %v984, inf
        %v1162 = vsel %vm1161, %v984, %v1160
        %vm1163 = vcmp.eq.f32.partialorder %v984, 0.0
        %v1164 = vand.u32 %v984, 2147483648
        %v1165 = vsel %vm1163, %v1164, %v1162
        %v1166 = vrsqrt.pop %v985
        %v1167 = vmul.f32 %v1166, %v985
        %v1168 = vmul.f32 %v1167, %v1166
        %v1169 = vmul.f32 0.5, %v1168
        %v1170 = vsub.f32 1.5, %v1169
        %v1171 = vmul.f32 %v1166, %v1170
        %v1172 = vmul.f32 %v985, %v1171
        %vm1173 = vcmp.eq.f32.partialorder %v985, inf
        %v1174 = vsel %vm1173, %v985, %v1172
        %vm1175 = vcmp.eq.f32.partialorder %v985, 0.0
        %v1176 = vand.u32 %v985, 2147483648
        %v1177 = vsel %vm1175, %v1176, %v1174
        %v1178 = vld [vmem:[%s2] sm:$0xff]
        %v1179 = vld [vmem:[%s3] sm:$0xff]
        %v1180 = vld [vmem:[%s3 + $0x8] sm:$0xff]
        %v1181 = vld [vmem:[%s3 + $0x10] sm:$0xff]
        %v1182 = vld [vmem:[%s3 + $0x18] sm:$0xff]
        %v1183 = vld [vmem:[%s3 + $0x20] sm:$0xff]
        %v1184 = vld [vmem:[%s3 + $0x28] sm:$0xff]
        %v1185 = vld [vmem:[%s3 + $0x30] sm:$0xff]
        %v1186 = vld [vmem:[%s3 + $0x38] sm:$0xff]
        %v1187 = vld [vmem:[%s3 + $0x40] sm:$0xff]
        %v1188 = vld [vmem:[%s3 + $0x48] sm:$0xff]
        %v1189 = vld [vmem:[%s3 + $0x50] sm:$0xff]
        %v1190 = vld [vmem:[%s3 + $0x58] sm:$0xff]
        %v1191 = vld [vmem:[%s3 + $0x60] sm:$0xff]
        %v1192 = vld [vmem:[%s3 + $0x68] sm:$0xff]
        %v1193 = vld [vmem:[%s3 + $0x70] sm:$0xff]
        %v1194 = vld [vmem:[%s3 + $0x78] sm:$0xff]
        %1195 = vmatpush.msra.mxu0 %v921
        %1196 = vmatpush.msra.mxu0 %v920
        %1197 = vmatpush.msra.mxu0 %v919
        %1198 = vmatpush.msra.mxu0 %v918
        %1199 = vmatpush.msra.mxu0 %v917
        %1200 = vmatpush.msra.mxu0 %v916
        %1201 = vmatpush.msra.mxu0 %v915
        %1202 = vmatpush.msra.mxu0 %v914
        %1203 = vmatpush.msra.mxu0 %v913
        %1204 = vmatpush.msra.mxu0 %v912
        %1205 = vmatpush.msra.mxu0 %v911
        %1206 = vmatpush.msra.mxu0 %v910
        %1207 = vmatpush.msra.mxu0 %v909
        %1208 = vmatpush.msra.mxu0 %v908
        %1209 = vmatpush.msra.mxu0 %v907
        %1210 = vmatpush.msra.mxu0 %v906
        %1211 = vmatmul.f32.gmra.mxu0 %v1178
        %v1212 = vpop.f32.mrf.mxu0
        %v1213 = vadd.f32 0.0, %v1212
        %1214 = vdwg.mxu0
        %v1215 = vmax.f32 %v1213, 0.0
        %vm1216 = vcmask 64512
        %v1218 = vsel %vm1216, %v1179, 0
        %v1221 = vsel %vm1216, %v1180, 0
        %v1224 = vsel %vm1216, %v1181, 0
        %v1227 = vsel %vm1216, %v1182, 0
        %v1230 = vsel %vm1216, %v1183, 0
        %v1233 = vsel %vm1216, %v1184, 0
        %v1236 = vsel %vm1216, %v1185, 0
        %v1239 = vsel %vm1216, %v1186, 0
        %v1242 = vsel %vm1216, %v1187, 0
        %v1245 = vsel %vm1216, %v1188, 0
        %v1248 = vsel %vm1216, %v1189, 0
        %v1251 = vsel %vm1216, %v1190, 0
        %v1254 = vsel %vm1216, %v1191, 0
        %v1257 = vsel %vm1216, %v1192, 0
        %v1260 = vsel %vm1216, %v1193, 0
        %v1263 = vsel %vm1216, %v1194, 0
        %1265 = vmatpush.msra.mxu0 0.0
        %1266 = vmatpush.msra.mxu0 0.0
        %1267 = vmatpush.msra.mxu0 0.0
        %1268 = vmatpush.msra.mxu0 0.0
        %1269 = vmatpush.msra.mxu0 0.0
        %1270 = vmatpush.msra.mxu0 0.0
        %1271 = vmatpush.msra.mxu0 0.0
        %1272 = vmatpush.msra.mxu0 0.0
        %1273 = vmatpush.msra.mxu0 0.0
        %1274 = vmatpush.msra.mxu0 0.0
        %1275 = vmatpush.msra.mxu0 0.0
        %1276 = vmatpush.msra.mxu0 0.0
        %1277 = vmatpush.msra.mxu0 0.0
        %1278 = vmatpush.msra.mxu0 0.0
        %1279 = vmatpush.msra.mxu0 0.0
        %1280 = vmatpush.msra.mxu0 %v1215
        %1281 = vmatmul.f32.gmra.mxu0 %v1218
        %v1282 = vpop.f32.mrf.mxu0
        %v1283 = vadd.f32 0.0, %v1282
        %1284 = vmatmul.f32.gmra.mxu0 %v1221
        %v1285 = vpop.f32.mrf.mxu0
        %v1286 = vadd.f32 0.0, %v1285
        %1287 = vmatmul.f32.gmra.mxu0 %v1224
        %v1288 = vpop.f32.mrf.mxu0
        %v1289 = vadd.f32 0.0, %v1288
        %1290 = vmatmul.f32.gmra.mxu0 %v1227
        %v1291 = vpop.f32.mrf.mxu0
        %v1292 = vadd.f32 0.0, %v1291
        %1293 = vmatmul.f32.gmra.mxu0 %v1230
        %v1294 = vpop.f32.mrf.mxu0
        %v1295 = vadd.f32 0.0, %v1294
        %1296 = vmatmul.f32.gmra.mxu0 %v1233
        %v1297 = vpop.f32.mrf.mxu0
        %v1298 = vadd.f32 0.0, %v1297
        %1299 = vmatmul.f32.gmra.mxu0 %v1236
        %v1300 = vpop.f32.mrf.mxu0
        %v1301 = vadd.f32 0.0, %v1300
        %1302 = vmatmul.f32.gmra.mxu0 %v1239
        %v1303 = vpop.f32.mrf.mxu0
        %v1304 = vadd.f32 0.0, %v1303
        %1305 = vmatmul.f32.gmra.mxu0 %v1242
        %v1306 = vpop.f32.mrf.mxu0
        %v1307 = vadd.f32 0.0, %v1306
        %1308 = vmatmul.f32.gmra.mxu0 %v1245
        %v1309 = vpop.f32.mrf.mxu0
        %v1310 = vadd.f32 0.0, %v1309
        %1311 = vmatmul.f32.gmra.mxu0 %v1248
        %v1312 = vpop.f32.mrf.mxu0
        %v1313 = vadd.f32 0.0, %v1312
        %1314 = vmatmul.f32.gmra.mxu0 %v1251
        %v1315 = vpop.f32.mrf.mxu0
        %v1316 = vadd.f32 0.0, %v1315
        %1317 = vmatmul.f32.gmra.mxu0 %v1254
        %v1318 = vpop.f32.mrf.mxu0
        %v1319 = vadd.f32 0.0, %v1318
        %1320 = vmatmul.f32.gmra.mxu0 %v1257
        %v1321 = vpop.f32.mrf.mxu0
        %v1322 = vadd.f32 0.0, %v1321
        %1323 = vmatmul.f32.gmra.mxu0 %v1260
        %v1324 = vpop.f32.mrf.mxu0
        %v1325 = vadd.f32 0.0, %v1324
        %1326 = vmatmul.f32.gmra.mxu0 %v1263
        %v1327 = vpop.f32.mrf.mxu0
        %v1328 = vadd.f32 0.0, %v1327
        %1329 = vdwg.mxu0
        %v1330 = vld [vmem:[%s4] sm:$0xff]
        %v1331 = vld [vmem:[%s5] sm:$0xff]
        %v1332 = vld [vmem:[%s5 + $0x8] sm:$0xff]
        %v1333 = vld [vmem:[%s5 + $0x10] sm:$0xff]
        %v1334 = vld [vmem:[%s5 + $0x18] sm:$0xff]
        %v1335 = vld [vmem:[%s5 + $0x20] sm:$0xff]
        %v1336 = vld [vmem:[%s5 + $0x28] sm:$0xff]
        %v1337 = vld [vmem:[%s5 + $0x30] sm:$0xff]
        %v1338 = vld [vmem:[%s5 + $0x38] sm:$0xff]
        %v1339 = vld [vmem:[%s5 + $0x40] sm:$0xff]
        %v1340 = vld [vmem:[%s5 + $0x48] sm:$0xff]
        %v1341 = vld [vmem:[%s5 + $0x50] sm:$0xff]
        %v1342 = vld [vmem:[%s5 + $0x58] sm:$0xff]
        %v1343 = vld [vmem:[%s5 + $0x60] sm:$0xff]
        %v1344 = vld [vmem:[%s5 + $0x68] sm:$0xff]
        %v1345 = vld [vmem:[%s5 + $0x70] sm:$0xff]
        %v1346 = vld [vmem:[%s5 + $0x78] sm:$0xff]
        %1347 = vmatpush.msra.mxu0 %v1177
        %1348 = vmatpush.msra.mxu0 %v1165
        %1349 = vmatpush.msra.mxu0 %v1153
        %1350 = vmatpush.msra.mxu0 %v1141
        %1351 = vmatpush.msra.mxu0 %v1129
        %1352 = vmatpush.msra.mxu0 %v1117
        %1353 = vmatpush.msra.mxu0 %v1105
        %1354 = vmatpush.msra.mxu0 %v1093
        %1355 = vmatpush.msra.mxu0 %v1081
        %1356 = vmatpush.msra.mxu0 %v1069
        %1357 = vmatpush.msra.mxu0 %v1057
        %1358 = vmatpush.msra.mxu0 %v1045
        %1359 = vmatpush.msra.mxu0 %v1033
        %1360 = vmatpush.msra.mxu0 %v1021
        %1361 = vmatpush.msra.mxu0 %v1009
        %1362 = vmatpush.msra.mxu0 %v997
        %1363 = vmatmul.f32.gmra.mxu0 %v1330
        %v1364 = vpop.f32.mrf.mxu0
        %v1365 = vadd.f32 0.0, %v1364
        %1366 = vdwg.mxu0
        %v1367 = vmax.f32 %v1365, 0.0
        %v1369 = vsel %vm1216, %v1331, 0
        %v1372 = vsel %vm1216, %v1332, 0
        %v1375 = vsel %vm1216, %v1333, 0
        %v1378 = vsel %vm1216, %v1334, 0
        %v1381 = vsel %vm1216, %v1335, 0
        %v1384 = vsel %vm1216, %v1336, 0
        %v1387 = vsel %vm1216, %v1337, 0
        %v1390 = vsel %vm1216, %v1338, 0
        %v1393 = vsel %vm1216, %v1339, 0
        %v1396 = vsel %vm1216, %v1340, 0
        %v1399 = vsel %vm1216, %v1341, 0
        %v1402 = vsel %vm1216, %v1342, 0
        %v1405 = vsel %vm1216, %v1343, 0
        %v1408 = vsel %vm1216, %v1344, 0
        %v1411 = vsel %vm1216, %v1345, 0
        %v1414 = vsel %vm1216, %v1346, 0
        %1416 = vmatpush.msra.mxu0 0.0
        %1417 = vmatpush.msra.mxu0 0.0
        %1418 = vmatpush.msra.mxu0 0.0
        %1419 = vmatpush.msra.mxu0 0.0
        %1420 = vmatpush.msra.mxu0 0.0
        %1421 = vmatpush.msra.mxu0 0.0
        %1422 = vmatpush.msra.mxu0 0.0
        %1423 = vmatpush.msra.mxu0 0.0
        %1424 = vmatpush.msra.mxu0 0.0
        %1425 = vmatpush.msra.mxu0 0.0
        %1426 = vmatpush.msra.mxu0 0.0
        %1427 = vmatpush.msra.mxu0 0.0
        %1428 = vmatpush.msra.mxu0 0.0
        %1429 = vmatpush.msra.mxu0 0.0
        %1430 = vmatpush.msra.mxu0 0.0
        %1431 = vmatpush.msra.mxu0 %v1367
        %1432 = vmatmul.f32.gmra.mxu0 %v1369
        %v1433 = vpop.f32.mrf.mxu0
        %v1434 = vadd.f32 0.0, %v1433
        %1435 = vmatmul.f32.gmra.mxu0 %v1372
        %v1436 = vpop.f32.mrf.mxu0
        %v1437 = vadd.f32 0.0, %v1436
        %1438 = vmatmul.f32.gmra.mxu0 %v1375
        %v1439 = vpop.f32.mrf.mxu0
        %v1440 = vadd.f32 0.0, %v1439
        %1441 = vmatmul.f32.gmra.mxu0 %v1378
        %v1442 = vpop.f32.mrf.mxu0
        %v1443 = vadd.f32 0.0, %v1442
        %1444 = vmatmul.f32.gmra.mxu0 %v1381
        %v1445 = vpop.f32.mrf.mxu0
        %v1446 = vadd.f32 0.0, %v1445
        %1447 = vmatmul.f32.gmra.mxu0 %v1384
        %v1448 = vpop.f32.mrf.mxu0
        %v1449 = vadd.f32 0.0, %v1448
        %1450 = vmatmul.f32.gmra.mxu0 %v1387
        %v1451 = vpop.f32.mrf.mxu0
        %v1452 = vadd.f32 0.0, %v1451
        %1453 = vmatmul.f32.gmra.mxu0 %v1390
        %v1454 = vpop.f32.mrf.mxu0
        %v1455 = vadd.f32 0.0, %v1454
        %1456 = vmatmul.f32.gmra.mxu0 %v1393
        %v1457 = vpop.f32.mrf.mxu0
        %v1458 = vadd.f32 0.0, %v1457
        %1459 = vmatmul.f32.gmra.mxu0 %v1396
        %v1460 = vpop.f32.mrf.mxu0
        %v1461 = vadd.f32 0.0, %v1460
        %1462 = vmatmul.f32.gmra.mxu0 %v1399
        %v1463 = vpop.f32.mrf.mxu0
        %v1464 = vadd.f32 0.0, %v1463
        %1465 = vmatmul.f32.gmra.mxu0 %v1402
        %v1466 = vpop.f32.mrf.mxu0
        %v1467 = vadd.f32 0.0, %v1466
        %1468 = vmatmul.f32.gmra.mxu0 %v1405
        %v1469 = vpop.f32.mrf.mxu0
        %v1470 = vadd.f32 0.0, %v1469
        %1471 = vmatmul.f32.gmra.mxu0 %v1408
        %v1472 = vpop.f32.mrf.mxu0
        %v1473 = vadd.f32 0.0, %v1472
        %1474 = vmatmul.f32.gmra.mxu0 %v1411
        %v1475 = vpop.f32.mrf.mxu0
        %v1476 = vadd.f32 0.0, %v1475
        %1477 = vmatmul.f32.gmra.mxu0 %v1414
        %v1478 = vpop.f32.mrf.mxu0
        %v1479 = vadd.f32 0.0, %v1478
        %1480 = vdwg.mxu0
        %v1481 = vrcp.pop %v597
        %v1482 = vmul.f32 %v597, %v1481
        %v1483 = vsub.f32 1.0, %v1482
        %v1484 = vmul.f32 %v1481, %v1483
        %v1485 = vadd.f32 %v1481, %v1484
        %vm1486 = vweird.f32 %v597
        %vm1487 = vweird.f32 %v1481
        %vm1488 = vmor %vm1486, %vm1487
        %v1489 = vsel %vm1488, %v1481, %v1485
        %v1490 = vand.u32 2147483647, %v597
        %vm1491 = vcmp.eq.f32.partialorder %v1490, 8.507059e+37
        %v1492 = vand.u32 %v597, 2147483648
        %v1493 = vor.u32 1.1754944e-38, %v1492
        %v1494 = vsel %vm1491, %v1493, %v1489
        %v1495 = vmul.f32 1.0, %v1494
        %v1496 = vrcp.pop %v609
        %v1497 = vmul.f32 %v609, %v1496
        %v1498 = vsub.f32 1.0, %v1497
        %v1499 = vmul.f32 %v1496, %v1498
        %v1500 = vadd.f32 %v1496, %v1499
        %vm1501 = vweird.f32 %v609
        %vm1502 = vweird.f32 %v1496
        %vm1503 = vmor %vm1501, %vm1502
        %v1504 = vsel %vm1503, %v1496, %v1500
        %v1505 = vand.u32 2147483647, %v609
        %vm1506 = vcmp.eq.f32.partialorder %v1505, 8.507059e+37
        %v1507 = vand.u32 %v609, 2147483648
        %v1508 = vor.u32 1.1754944e-38, %v1507
        %v1509 = vsel %vm1506, %v1508, %v1504
        %v1510 = vmul.f32 1.0, %v1509
        %v1511 = vrcp.pop %v621
        %v1512 = vmul.f32 %v621, %v1511
        %v1513 = vsub.f32 1.0, %v1512
        %v1514 = vmul.f32 %v1511, %v1513
        %v1515 = vadd.f32 %v1511, %v1514
        %vm1516 = vweird.f32 %v621
        %vm1517 = vweird.f32 %v1511
        %vm1518 = vmor %vm1516, %vm1517
        %v1519 = vsel %vm1518, %v1511, %v1515
        %v1520 = vand.u32 2147483647, %v621
        %vm1521 = vcmp.eq.f32.partialorder %v1520, 8.507059e+37
        %v1522 = vand.u32 %v621, 2147483648
        %v1523 = vor.u32 1.1754944e-38, %v1522
        %v1524 = vsel %vm1521, %v1523, %v1519
        %v1525 = vmul.f32 1.0, %v1524
        %v1526 = vrcp.pop %v633
        %v1527 = vmul.f32 %v633, %v1526
        %v1528 = vsub.f32 1.0, %v1527
        %v1529 = vmul.f32 %v1526, %v1528
        %v1530 = vadd.f32 %v1526, %v1529
        %vm1531 = vweird.f32 %v633
        %vm1532 = vweird.f32 %v1526
        %vm1533 = vmor %vm1531, %vm1532
        %v1534 = vsel %vm1533, %v1526, %v1530
        %v1535 = vand.u32 2147483647, %v633
        %vm1536 = vcmp.eq.f32.partialorder %v1535, 8.507059e+37
        %v1537 = vand.u32 %v633, 2147483648
        %v1538 = vor.u32 1.1754944e-38, %v1537
        %v1539 = vsel %vm1536, %v1538, %v1534
        %v1540 = vmul.f32 1.0, %v1539
        %v1541 = vrcp.pop %v645
        %v1542 = vmul.f32 %v645, %v1541
        %v1543 = vsub.f32 1.0, %v1542
        %v1544 = vmul.f32 %v1541, %v1543
        %v1545 = vadd.f32 %v1541, %v1544
        %vm1546 = vweird.f32 %v645
        %vm1547 = vweird.f32 %v1541
        %vm1548 = vmor %vm1546, %vm1547
        %v1549 = vsel %vm1548, %v1541, %v1545
        %v1550 = vand.u32 2147483647, %v645
        %vm1551 = vcmp.eq.f32.partialorder %v1550, 8.507059e+37
        %v1552 = vand.u32 %v645, 2147483648
        %v1553 = vor.u32 1.1754944e-38, %v1552
        %v1554 = vsel %vm1551, %v1553, %v1549
        %v1555 = vmul.f32 1.0, %v1554
        %v1556 = vrcp.pop %v657
        %v1557 = vmul.f32 %v657, %v1556
        %v1558 = vsub.f32 1.0, %v1557
        %v1559 = vmul.f32 %v1556, %v1558
        %v1560 = vadd.f32 %v1556, %v1559
        %vm1561 = vweird.f32 %v657
        %vm1562 = vweird.f32 %v1556
        %vm1563 = vmor %vm1561, %vm1562
        %v1564 = vsel %vm1563, %v1556, %v1560
        %v1565 = vand.u32 2147483647, %v657
        %vm1566 = vcmp.eq.f32.partialorder %v1565, 8.507059e+37
        %v1567 = vand.u32 %v657, 2147483648
        %v1568 = vor.u32 1.1754944e-38, %v1567
        %v1569 = vsel %vm1566, %v1568, %v1564
        %v1570 = vmul.f32 1.0, %v1569
        %v1571 = vrcp.pop %v669
        %v1572 = vmul.f32 %v669, %v1571
        %v1573 = vsub.f32 1.0, %v1572
        %v1574 = vmul.f32 %v1571, %v1573
        %v1575 = vadd.f32 %v1571, %v1574
        %vm1576 = vweird.f32 %v669
        %vm1577 = vweird.f32 %v1571
        %vm1578 = vmor %vm1576, %vm1577
        %v1579 = vsel %vm1578, %v1571, %v1575
        %v1580 = vand.u32 2147483647, %v669
        %vm1581 = vcmp.eq.f32.partialorder %v1580, 8.507059e+37
        %v1582 = vand.u32 %v669, 2147483648
        %v1583 = vor.u32 1.1754944e-38, %v1582
        %v1584 = vsel %vm1581, %v1583, %v1579
        %v1585 = vmul.f32 1.0, %v1584
        %v1586 = vrcp.pop %v681
        %v1587 = vmul.f32 %v681, %v1586
        %v1588 = vsub.f32 1.0, %v1587
        %v1589 = vmul.f32 %v1586, %v1588
        %v1590 = vadd.f32 %v1586, %v1589
        %vm1591 = vweird.f32 %v681
        %vm1592 = vweird.f32 %v1586
        %vm1593 = vmor %vm1591, %vm1592
        %v1594 = vsel %vm1593, %v1586, %v1590
        %v1595 = vand.u32 2147483647, %v681
        %vm1596 = vcmp.eq.f32.partialorder %v1595, 8.507059e+37
        %v1597 = vand.u32 %v681, 2147483648
        %v1598 = vor.u32 1.1754944e-38, %v1597
        %v1599 = vsel %vm1596, %v1598, %v1594
        %v1600 = vmul.f32 1.0, %v1599
        %v1601 = vrcp.pop %v693
        %v1602 = vmul.f32 %v693, %v1601
        %v1603 = vsub.f32 1.0, %v1602
        %v1604 = vmul.f32 %v1601, %v1603
        %v1605 = vadd.f32 %v1601, %v1604
        %vm1606 = vweird.f32 %v693
        %vm1607 = vweird.f32 %v1601
        %vm1608 = vmor %vm1606, %vm1607
        %v1609 = vsel %vm1608, %v1601, %v1605
        %v1610 = vand.u32 2147483647, %v693
        %vm1611 = vcmp.eq.f32.partialorder %v1610, 8.507059e+37
        %v1612 = vand.u32 %v693, 2147483648
        %v1613 = vor.u32 1.1754944e-38, %v1612
        %v1614 = vsel %vm1611, %v1613, %v1609
        %v1615 = vmul.f32 1.0, %v1614
        %v1616 = vrcp.pop %v705
        %v1617 = vmul.f32 %v705, %v1616
        %v1618 = vsub.f32 1.0, %v1617
        %v1619 = vmul.f32 %v1616, %v1618
        %v1620 = vadd.f32 %v1616, %v1619
        %vm1621 = vweird.f32 %v705
        %vm1622 = vweird.f32 %v1616
        %vm1623 = vmor %vm1621, %vm1622
        %v1624 = vsel %vm1623, %v1616, %v1620
        %v1625 = vand.u32 2147483647, %v705
        %vm1626 = vcmp.eq.f32.partialorder %v1625, 8.507059e+37
        %v1627 = vand.u32 %v705, 2147483648
        %v1628 = vor.u32 1.1754944e-38, %v1627
        %v1629 = vsel %vm1626, %v1628, %v1624
        %v1630 = vmul.f32 1.0, %v1629
        %v1631 = vrcp.pop %v717
        %v1632 = vmul.f32 %v717, %v1631
        %v1633 = vsub.f32 1.0, %v1632
        %v1634 = vmul.f32 %v1631, %v1633
        %v1635 = vadd.f32 %v1631, %v1634
        %vm1636 = vweird.f32 %v717
        %vm1637 = vweird.f32 %v1631
        %vm1638 = vmor %vm1636, %vm1637
        %v1639 = vsel %vm1638, %v1631, %v1635
        %v1640 = vand.u32 2147483647, %v717
        %vm1641 = vcmp.eq.f32.partialorder %v1640, 8.507059e+37
        %v1642 = vand.u32 %v717, 2147483648
        %v1643 = vor.u32 1.1754944e-38, %v1642
        %v1644 = vsel %vm1641, %v1643, %v1639
        %v1645 = vmul.f32 1.0, %v1644
        %v1646 = vrcp.pop %v729
        %v1647 = vmul.f32 %v729, %v1646
        %v1648 = vsub.f32 1.0, %v1647
        %v1649 = vmul.f32 %v1646, %v1648
        %v1650 = vadd.f32 %v1646, %v1649
        %vm1651 = vweird.f32 %v729
        %vm1652 = vweird.f32 %v1646
        %vm1653 = vmor %vm1651, %vm1652
        %v1654 = vsel %vm1653, %v1646, %v1650
        %v1655 = vand.u32 2147483647, %v729
        %vm1656 = vcmp.eq.f32.partialorder %v1655, 8.507059e+37
        %v1657 = vand.u32 %v729, 2147483648
        %v1658 = vor.u32 1.1754944e-38, %v1657
        %v1659 = vsel %vm1656, %v1658, %v1654
        %v1660 = vmul.f32 1.0, %v1659
        %v1661 = vrcp.pop %v741
        %v1662 = vmul.f32 %v741, %v1661
        %v1663 = vsub.f32 1.0, %v1662
        %v1664 = vmul.f32 %v1661, %v1663
        %v1665 = vadd.f32 %v1661, %v1664
        %vm1666 = vweird.f32 %v741
        %vm1667 = vweird.f32 %v1661
        %vm1668 = vmor %vm1666, %vm1667
        %v1669 = vsel %vm1668, %v1661, %v1665
        %v1670 = vand.u32 2147483647, %v741
        %vm1671 = vcmp.eq.f32.partialorder %v1670, 8.507059e+37
        %v1672 = vand.u32 %v741, 2147483648
        %v1673 = vor.u32 1.1754944e-38, %v1672
        %v1674 = vsel %vm1671, %v1673, %v1669
        %v1675 = vmul.f32 1.0, %v1674
        %v1676 = vrcp.pop %v753
        %v1677 = vmul.f32 %v753, %v1676
        %v1678 = vsub.f32 1.0, %v1677
        %v1679 = vmul.f32 %v1676, %v1678
        %v1680 = vadd.f32 %v1676, %v1679
        %vm1681 = vweird.f32 %v753
        %vm1682 = vweird.f32 %v1676
        %vm1683 = vmor %vm1681, %vm1682
        %v1684 = vsel %vm1683, %v1676, %v1680
        %v1685 = vand.u32 2147483647, %v753
        %vm1686 = vcmp.eq.f32.partialorder %v1685, 8.507059e+37
        %v1687 = vand.u32 %v753, 2147483648
        %v1688 = vor.u32 1.1754944e-38, %v1687
        %v1689 = vsel %vm1686, %v1688, %v1684
        %v1690 = vmul.f32 1.0, %v1689
        %v1691 = vrcp.pop %v765
        %v1692 = vmul.f32 %v765, %v1691
        %v1693 = vsub.f32 1.0, %v1692
        %v1694 = vmul.f32 %v1691, %v1693
        %v1695 = vadd.f32 %v1691, %v1694
        %vm1696 = vweird.f32 %v765
        %vm1697 = vweird.f32 %v1691
        %vm1698 = vmor %vm1696, %vm1697
        %v1699 = vsel %vm1698, %v1691, %v1695
        %v1700 = vand.u32 2147483647, %v765
        %vm1701 = vcmp.eq.f32.partialorder %v1700, 8.507059e+37
        %v1702 = vand.u32 %v765, 2147483648
        %v1703 = vor.u32 1.1754944e-38, %v1702
        %v1704 = vsel %vm1701, %v1703, %v1699
        %v1705 = vmul.f32 1.0, %v1704
        %v1706 = vrcp.pop %v777
        %v1707 = vmul.f32 %v777, %v1706
        %v1708 = vsub.f32 1.0, %v1707
        %v1709 = vmul.f32 %v1706, %v1708
        %v1710 = vadd.f32 %v1706, %v1709
        %vm1711 = vweird.f32 %v777
        %vm1712 = vweird.f32 %v1706
        %vm1713 = vmor %vm1711, %vm1712
        %v1714 = vsel %vm1713, %v1706, %v1710
        %v1715 = vand.u32 2147483647, %v777
        %vm1716 = vcmp.eq.f32.partialorder %v1715, 8.507059e+37
        %v1717 = vand.u32 %v777, 2147483648
        %v1718 = vor.u32 1.1754944e-38, %v1717
        %v1719 = vsel %vm1716, %v1718, %v1714
        %v1720 = vmul.f32 1.0, %v1719
        %v1721 = vmul.f32 %v1434, %v1495
        %v1722 = vmul.f32 %v1437, %v1510
        %v1723 = vmul.f32 %v1440, %v1525
        %v1724 = vmul.f32 %v1443, %v1540
        %v1725 = vmul.f32 %v1446, %v1555
        %v1726 = vmul.f32 %v1449, %v1570
        %v1727 = vmul.f32 %v1452, %v1585
        %v1728 = vmul.f32 %v1455, %v1600
        %v1729 = vmul.f32 %v1458, %v1615
        %v1730 = vmul.f32 %v1461, %v1630
        %v1731 = vmul.f32 %v1464, %v1645
        %v1732 = vmul.f32 %v1467, %v1660
        %v1733 = vmul.f32 %v1470, %v1675
        %v1734 = vmul.f32 %v1473, %v1690
        %v1735 = vmul.f32 %v1476, %v1705
        %v1736 = vmul.f32 %v1479, %v1720
        %v1737 = vmul.f32 %v506, %v1721
        %v1738 = vmul.f32 %v507, %v1722
        %v1739 = vmul.f32 %v508, %v1723
        %v1740 = vmul.f32 %v509, %v1724
        %v1741 = vmul.f32 %v510, %v1725
        %v1742 = vmul.f32 %v511, %v1726
        %v1743 = vmul.f32 %v512, %v1727
        %v1744 = vmul.f32 %v513, %v1728
        %v1745 = vmul.f32 %v514, %v1729
        %v1746 = vmul.f32 %v515, %v1730
        %v1747 = vmul.f32 %v516, %v1731
        %v1748 = vmul.f32 %v517, %v1732
        %v1749 = vmul.f32 %v518, %v1733
        %v1750 = vmul.f32 %v519, %v1734
        %v1751 = vmul.f32 %v520, %v1735
        %v1752 = vmul.f32 %v521, %v1736
        %v1753 = vsub.f32 %v1283, %v1737
        %v1754 = vsub.f32 %v1286, %v1738
        %v1755 = vsub.f32 %v1289, %v1739
        %v1756 = vsub.f32 %v1292, %v1740
        %v1757 = vsub.f32 %v1295, %v1741
        %v1758 = vsub.f32 %v1298, %v1742
        %v1759 = vsub.f32 %v1301, %v1743
        %v1760 = vsub.f32 %v1304, %v1744
        %v1761 = vsub.f32 %v1307, %v1745
        %v1762 = vsub.f32 %v1310, %v1746
        %v1763 = vsub.f32 %v1313, %v1747
        %v1764 = vsub.f32 %v1316, %v1748
        %v1765 = vsub.f32 %v1319, %v1749
        %v1766 = vsub.f32 %v1322, %v1750
        %v1767 = vsub.f32 %v1325, %v1751
        %v1768 = vsub.f32 %v1328, %v1752
        %1770 = vset.pattern.permute.xlu0 0
        %1771 = vperm.xlu0 %1770, %v1721
        %v1772 = vpop.permute.xlu0 %1771
        %1775 = vset.pattern.permute.xlu0 0
        %1776 = vperm.xlu0 %1775, %v1722
        %v1777 = vpop.permute.xlu0 %1776
        %1780 = vset.pattern.permute.xlu0 0
        %1781 = vperm.xlu0 %1780, %v1723
        %v1782 = vpop.permute.xlu0 %1781
        %1785 = vset.pattern.permute.xlu0 0
        %1786 = vperm.xlu0 %1785, %v1724
        %v1787 = vpop.permute.xlu0 %1786
        %1790 = vset.pattern.permute.xlu0 0
        %1791 = vperm.xlu0 %1790, %v1725
        %v1792 = vpop.permute.xlu0 %1791
        %1795 = vset.pattern.permute.xlu0 0
        %1796 = vperm.xlu0 %1795, %v1726
        %v1797 = vpop.permute.xlu0 %1796
        %1800 = vset.pattern.permute.xlu0 0
        %1801 = vperm.xlu0 %1800, %v1727
        %v1802 = vpop.permute.xlu0 %1801
        %1805 = vset.pattern.permute.xlu0 0
        %1806 = vperm.xlu0 %1805, %v1728
        %v1807 = vpop.permute.xlu0 %1806
        %1810 = vset.pattern.permute.xlu0 0
        %1811 = vperm.xlu0 %1810, %v1729
        %v1812 = vpop.permute.xlu0 %1811
        %1815 = vset.pattern.permute.xlu0 0
        %1816 = vperm.xlu0 %1815, %v1730
        %v1817 = vpop.permute.xlu0 %1816
        %1820 = vset.pattern.permute.xlu0 0
        %1821 = vperm.xlu0 %1820, %v1731
        %v1822 = vpop.permute.xlu0 %1821
        %1825 = vset.pattern.permute.xlu0 0
        %1826 = vperm.xlu0 %1825, %v1732
        %v1827 = vpop.permute.xlu0 %1826
        %1830 = vset.pattern.permute.xlu0 0
        %1831 = vperm.xlu0 %1830, %v1733
        %v1832 = vpop.permute.xlu0 %1831
        %1835 = vset.pattern.permute.xlu0 0
        %1836 = vperm.xlu0 %1835, %v1734
        %v1837 = vpop.permute.xlu0 %1836
        %1840 = vset.pattern.permute.xlu0 0
        %1841 = vperm.xlu0 %1840, %v1735
        %v1842 = vpop.permute.xlu0 %1841
        %1845 = vset.pattern.permute.xlu0 0
        %1846 = vperm.xlu0 %1845, %v1736
        %v1847 = vpop.permute.xlu0 %1846
        %v1849 = vmul.f32 %v314, %v1772
        %v1850 = vmul.f32 %v315, %v1772
        %v1851 = vmul.f32 %v316, %v1777
        %v1852 = vmul.f32 %v317, %v1777
        %v1853 = vmul.f32 %v318, %v1782
        %v1854 = vmul.f32 %v319, %v1782
        %v1855 = vmul.f32 %v320, %v1787
        %v1856 = vmul.f32 %v321, %v1787
        %v1857 = vmul.f32 %v322, %v1792
        %v1858 = vmul.f32 %v323, %v1792
        %v1859 = vmul.f32 %v324, %v1797
        %v1860 = vmul.f32 %v325, %v1797
        %v1861 = vmul.f32 %v326, %v1802
        %v1862 = vmul.f32 %v327, %v1802
        %v1863 = vmul.f32 %v328, %v1807
        %v1864 = vmul.f32 %v329, %v1807
        %v1865 = vmul.f32 %v330, %v1812
        %v1866 = vmul.f32 %v331, %v1812
        %v1867 = vmul.f32 %v332, %v1817
        %v1868 = vmul.f32 %v333, %v1817
        %v1869 = vmul.f32 %v334, %v1822
        %v1870 = vmul.f32 %v335, %v1822
        %v1871 = vmul.f32 %v336, %v1827
        %v1872 = vmul.f32 %v337, %v1827
        %v1873 = vmul.f32 %v338, %v1832
        %v1874 = vmul.f32 %v339, %v1832
        %v1875 = vmul.f32 %v340, %v1837
        %v1876 = vmul.f32 %v341, %v1837
        %v1877 = vmul.f32 %v342, %v1842
        %v1878 = vmul.f32 %v343, %v1842
        %v1879 = vmul.f32 %v344, %v1847
        %v1880 = vmul.f32 %v345, %v1847
        %1882 = vset.pattern.permute.xlu0 0
        %1883 = vperm.xlu0 %1882, %v1753
        %v1884 = vpop.permute.xlu0 %1883
        %1887 = vset.pattern.permute.xlu0 0
        %1888 = vperm.xlu0 %1887, %v1754
        %v1889 = vpop.permute.xlu0 %1888
        %1892 = vset.pattern.permute.xlu0 0
        %1893 = vperm.xlu0 %1892, %v1755
        %v1894 = vpop.permute.xlu0 %1893
        %1897 = vset.pattern.permute.xlu0 0
        %1898 = vperm.xlu0 %1897, %v1756
        %v1899 = vpop.permute.xlu0 %1898
        %1902 = vset.pattern.permute.xlu0 0
        %1903 = vperm.xlu0 %1902, %v1757
        %v1904 = vpop.permute.xlu0 %1903
        %1907 = vset.pattern.permute.xlu0 0
        %1908 = vperm.xlu0 %1907, %v1758
        %v1909 = vpop.permute.xlu0 %1908
        %1912 = vset.pattern.permute.xlu0 0
        %1913 = vperm.xlu0 %1912, %v1759
        %v1914 = vpop.permute.xlu0 %1913
        %1917 = vset.pattern.permute.xlu0 0
        %1918 = vperm.xlu0 %1917, %v1760
        %v1919 = vpop.permute.xlu0 %1918
        %1922 = vset.pattern.permute.xlu0 0
        %1923 = vperm.xlu0 %1922, %v1761
        %v1924 = vpop.permute.xlu0 %1923
        %1927 = vset.pattern.permute.xlu0 0
        %1928 = vperm.xlu0 %1927, %v1762
        %v1929 = vpop.permute.xlu0 %1928
        %1932 = vset.pattern.permute.xlu0 0
        %1933 = vperm.xlu0 %1932, %v1763
        %v1934 = vpop.permute.xlu0 %1933
        %1937 = vset.pattern.permute.xlu0 0
        %1938 = vperm.xlu0 %1937, %v1764
        %v1939 = vpop.permute.xlu0 %1938
        %1942 = vset.pattern.permute.xlu0 0
        %1943 = vperm.xlu0 %1942, %v1765
        %v1944 = vpop.permute.xlu0 %1943
        %1947 = vset.pattern.permute.xlu0 0
        %1948 = vperm.xlu0 %1947, %v1766
        %v1949 = vpop.permute.xlu0 %1948
        %1952 = vset.pattern.permute.xlu0 0
        %1953 = vperm.xlu0 %1952, %v1767
        %v1954 = vpop.permute.xlu0 %1953
        %1957 = vset.pattern.permute.xlu0 0
        %1958 = vperm.xlu0 %1957, %v1768
        %v1959 = vpop.permute.xlu0 %1958
        %v1961 = vadd.f32 %v1849, %v1884
        %v1962 = vadd.f32 %v1850, %v1884
        %v1963 = vadd.f32 %v1851, %v1889
        %v1964 = vadd.f32 %v1852, %v1889
        %v1965 = vadd.f32 %v1853, %v1894
        %v1966 = vadd.f32 %v1854, %v1894
        %v1967 = vadd.f32 %v1855, %v1899
        %v1968 = vadd.f32 %v1856, %v1899
        %v1969 = vadd.f32 %v1857, %v1904
        %v1970 = vadd.f32 %v1858, %v1904
        %v1971 = vadd.f32 %v1859, %v1909
        %v1972 = vadd.f32 %v1860, %v1909
        %v1973 = vadd.f32 %v1861, %v1914
        %v1974 = vadd.f32 %v1862, %v1914
        %v1975 = vadd.f32 %v1863, %v1919
        %v1976 = vadd.f32 %v1864, %v1919
        %v1977 = vadd.f32 %v1865, %v1924
        %v1978 = vadd.f32 %v1866, %v1924
        %v1979 = vadd.f32 %v1867, %v1929
        %v1980 = vadd.f32 %v1868, %v1929
        %v1981 = vadd.f32 %v1869, %v1934
        %v1982 = vadd.f32 %v1870, %v1934
        %v1983 = vadd.f32 %v1871, %v1939
        %v1984 = vadd.f32 %v1872, %v1939
        %v1985 = vadd.f32 %v1873, %v1944
        %v1986 = vadd.f32 %v1874, %v1944
        %v1987 = vadd.f32 %v1875, %v1949
        %v1988 = vadd.f32 %v1876, %v1949
        %v1989 = vadd.f32 %v1877, %v1954
        %v1990 = vadd.f32 %v1878, %v1954
        %v1991 = vadd.f32 %v1879, %v1959
        %v1992 = vadd.f32 %v1880, %v1959
        %1993 = vst [vmem:[%s313] sm:$0xff] %v1961
        %1994 = vst [vmem:[%s313 + $0x8] sm:$0xff] %v1962
        %1995 = vst [vmem:[%s313 + $0x10] sm:$0xff] %v1963
        %1996 = vst [vmem:[%s313 + $0x18] sm:$0xff] %v1964
        %1997 = vst [vmem:[%s313 + $0x20] sm:$0xff] %v1965
        %1998 = vst [vmem:[%s313 + $0x28] sm:$0xff] %v1966
        %1999 = vst [vmem:[%s313 + $0x30] sm:$0xff] %v1967
        %2000 = vst [vmem:[%s313 + $0x38] sm:$0xff] %v1968
        %2001 = vst [vmem:[%s313 + $0x40] sm:$0xff] %v1969
        %2002 = vst [vmem:[%s313 + $0x48] sm:$0xff] %v1970
        %2003 = vst [vmem:[%s313 + $0x50] sm:$0xff] %v1971
        %2004 = vst [vmem:[%s313 + $0x58] sm:$0xff] %v1972
        %2005 = vst [vmem:[%s313 + $0x60] sm:$0xff] %v1973
        %2006 = vst [vmem:[%s313 + $0x68] sm:$0xff] %v1974
        %2007 = vst [vmem:[%s313 + $0x70] sm:$0xff] %v1975
        %2008 = vst [vmem:[%s313 + $0x78] sm:$0xff] %v1976
        %2009 = vst [vmem:[%s313 + $0x80] sm:$0xff] %v1977
        %2010 = vst [vmem:[%s313 + $0x88] sm:$0xff] %v1978
        %2011 = vst [vmem:[%s313 + $0x90] sm:$0xff] %v1979
        %2012 = vst [vmem:[%s313 + $0x98] sm:$0xff] %v1980
        %2013 = vst [vmem:[%s313 + $0xa0] sm:$0xff] %v1981
        %2014 = vst [vmem:[%s313 + $0xa8] sm:$0xff] %v1982
        %2015 = vst [vmem:[%s313 + $0xb0] sm:$0xff] %v1983
        %2016 = vst [vmem:[%s313 + $0xb8] sm:$0xff] %v1984
        %2017 = vst [vmem:[%s313 + $0xc0] sm:$0xff] %v1985
        %2018 = vst [vmem:[%s313 + $0xc8] sm:$0xff] %v1986
        %2019 = vst [vmem:[%s313 + $0xd0] sm:$0xff] %v1987
        %2020 = vst [vmem:[%s313 + $0xd8] sm:$0xff] %v1988
        %2021 = vst [vmem:[%s313 + $0xe0] sm:$0xff] %v1989
        %2022 = vst [vmem:[%s313 + $0xe8] sm:$0xff] %v1990
        %2023 = vst [vmem:[%s313 + $0xf0] sm:$0xff] %v1991
        %2024 = vst [vmem:[%s313 + $0xf8] sm:$0xff] %v1992
        %s2025 = sand.u32 %s170, 1
        %s2026 = scalar_lea.sflag [#allocation4], %s2025
        %s2027 = sand.u32 %s170, 1
        %s2028 = smul.addr %s2027, 256
        %s2029 = scalar_lea.vmem [#allocation7], %s2028
        // Predicated region
        $region53: #{tpu_custom_call.1} parent=43 // pred_check
          %p2030 = pneg %p180
        $region54: #{tpu_custom_call.1} parent=43 // pred_check_branch
          %2032 = sbr.rel (%p2030) target = $region56
        $region55: #{tpu_custom_call.1} parent=43 // pred_region
          %2034 = vsyncadd %s2026, 0
          %s2035 = smul.addr %s26, 32
          %s2036 = smul.addr %s2035, 8
          %s2037 = scalar_lea.hbm %s6, %s2036
          %s2038 = sshll.u32 %s2029, 4
          %s2039 = int_to_ptr.vmem [resolvable:$true] %s2038
          %s2040 = sshll.u32 %s2037, 4
          %s2041 = int_to_ptr.hbm [resolvable:$true] %s2040
          %2046 = dma.vmem_to_hbm [thread:$0]  %s2039, 4096, %s2041, %s2026, 256, 256, 16
        $region56: #{tpu_custom_call.1} parent=43 // pred_fallthru
          _
      $region44: #{tpu_custom_call.1} parent=5 // pred_fallthru
        _
      %p2047 = scmp.le.s32.totalorder 2, %s21
      // Predicated region
      $region57: #{tpu_custom_call.1} parent=5 // pred_check
        %p2048 = pneg %p2047
      $region58: #{tpu_custom_call.1} parent=5 // pred_check_branch
        %2050 = sbr.rel (%p2048) target = $region60
      $region59: #{tpu_custom_call.1} parent=5 // pred_region
        %s2051 = ssub.s32 %s21, 2
        // Predicated region
        $region61: #{tpu_custom_call.1} parent=59 // pred_check
          %p2052 = pneg %p186
        $region62: #{tpu_custom_call.1} parent=59 // pred_check_branch
          %2054 = sbr.rel (%p2052) target = $region64
        $region63: #{tpu_custom_call.1} parent=59 // pred_region
          %s2055 = sand.u32 %s171, 1
          %s2056 = scalar_lea.sflag [#allocation4], %s2055
          %s2057 = sand.u32 %s171, 1
          %s2058 = smul.addr %s2057, 256
          %s2059 = scalar_lea.vmem [#allocation7], %s2058
          %2061 = dma.done %s2056, 4096
        $region64: #{tpu_custom_call.1} parent=59 // pred_fallthru
          _
      $region60: #{tpu_custom_call.1} parent=5 // pred_fallthru
        _
    $region6: #{tpu_custom_call.1} parent=1 // loop_footer
      %s25 = sadd.s32 1, %s21
    $region7: #{tpu_custom_call.1} parent=1 // loop_footer_branch
      %20 = sbr.rel target = $region3
    $region8: #{tpu_custom_call.1} parent=1 // loop_exit
      _
    %2062 = vsyncpa [#allocation3], 1
    %s2063 = scalar_lea.sflag [#allocation3], 1
    %2064 = vsyncpa %s2063, 1
    %2065 = vsyncpa [#allocation6], 1
    %s2066 = scalar_lea.sflag [#allocation6], 1
    %2067 = vsyncpa %s2066, 1
    %2068 = vsyncpa [#allocation4], 1
    %s2069 = scalar_lea.sflag [#allocation4], 1
    %2070 = vsyncpa %s2069, 1

</llo_original>
